<compile_context>
chip_gen: v5e
topology: v5e:2x2
jax: 0.10.0
libtpu: 0.0.40
codegen_flags: <defaults>
</compile_context>

<pallas_src>
import functools
import math

import jax
import jax.numpy as jnp
from jax.experimental import pallas as pl
from jax.experimental.pallas import tpu as pltpu


# v7x has 64 MiB physical VMEM (half of v5e/v6e).  56 MiB limit + 40 MiB tile
# budget leaves headroom on every generation; raise to ~100 MiB on v5e/v6e.
_VMEM_LIMIT_BYTES = 56 * 1024 * 1024
_VMEM_TILE_BUDGET = 40 * 1024 * 1024


# ---------------------------------------------------------------------------
# In-kernel helpers
# ---------------------------------------------------------------------------
def _shift_w(x, d):
    """Shift a (R, W, C) tile along W by d in {-1, 0, +1} with zero fill.

    d=+1: out[:, w] = x[:, w-1] (zero at w=0);  d=-1: out[:, w] = x[:, w+1].
    """
    # TODO(synk): pltpu.roll along W (XLU slot) + one-column mask could replace
    # this slice+concat once the rotate direction is pinned down on hardware.
    if d == 0:
        return x
    z = jnp.zeros_like(x[:, :1, :])
    if d == 1:
        return jnp.concatenate([z, x[:, :-1, :]], axis=1)
    return jnp.concatenate([x[:, 1:, :], z], axis=1)


def _conv3x3_tile(x, wkw, bias, rows_out):
    """3x3 'same'(W)-padded conv of a row tile via 3 accumulated MXU dots.

    x:    (rows_out + 2, W, Cin) in the MXU dtype; rows outside the image must
          already be zero (W borders are handled here by the zero shift).
    wkw:  (3, 3*Cin, Cout) in the MXU dtype; per-kw slabs, rows ordered (kh, ci).
    bias: (1, Cout) f32.
    Returns (rows_out, W, Cout) f32.
    """
    rows_in, W, cin = x.shape
    cout = wkw.shape[-1]
    acc = jnp.zeros((rows_out * W, cout), jnp.float32)
    for kw, d in ((0, 1), (1, 0), (2, -1)):
        xs = _shift_w(x, d)
        # Channel-concat across kh (cheap leading-axis slices) -> K = 3*Cin.
        p = jnp.concatenate([xs[kh:kh + rows_out] for kh in range(3)], axis=-1)
        acc = acc + jnp.dot(p.reshape(rows_out * W, 3 * cin), wkw[kw],
                            preferred_element_type=jnp.float32)
    return (acc + bias).reshape(rows_out, W, cout)


def _conv3x3_kernel(x_ref, xt_ref, xb_ref, w_ref, b_ref, *rest,
                    apply_relu, has_sub, has_skip, res_scale, th, H,
                    mxu_dtype, pixel_shuffle, out_nchw):
    """One row tile of a 3x3 'same' conv with optional fused epilogues.

    x_ref:  (1, th, W, Cin)  rows [i*th, i*th+th) (tail rows may be padding)
    xt_ref: (1, 1,  W, Cin)  row i*th-1 (clamped; masked if outside)
    xb_ref: (1, 1,  W, Cin)  row i*th+th (clamped; masked if outside)
    w_ref:  (3, 3*Cin, Cout) per-kw weight slabs (MXU dtype)
    b_ref:  (1, Cout) f32
    rest:   [sub_ref (1,Cin)], [skip_ref (1,th,W,Cout)], o_ref
    """
    rest = list(rest)
    sub_ref = rest.pop(0) if has_sub else None
    skip_ref = rest.pop(0) if has_skip else None
    o_ref = rest.pop(0)

    i = pl.program_id(1)
    row0 = i * th

    mid = x_ref[0].astype(jnp.float32)            # (th, W, Cin)
    top = xt_ref[0, 0].astype(jnp.float32)        # (W, Cin)
    bot = xb_ref[0, 0].astype(jnp.float32)        # (W, Cin)

    if has_sub:                                    # fused MeanShift (exact:
        sub = sub_ref[0].astype(jnp.float32)       # applied before zero pad)
        mid = mid - sub
        top = top - sub
        bot = bot - sub

    # Zero rows that lie outside the image (global zero padding + uneven tail).
    top = jnp.where(row0 - 1 >= 0, top, 0.0)
    bot = jnp.where(row0 + th <= H - 1, bot, 0.0)
    if H % th:
        rr = jax.lax.broadcasted_iota(jnp.int32, (th, 1, 1), 0) + row0
        mid = jnp.where(rr <= H - 1, mid, 0.0)

    x = jnp.concatenate([top[None], mid, bot[None]], axis=0).astype(mxu_dtype)
    out = _conv3x3_tile(x, w_ref[...], b_ref[...].astype(jnp.float32), th)
    if apply_relu:
        out = jnp.maximum(out, 0.0)
    if has_skip:
        out = skip_ref[0].astype(jnp.float32) + jnp.float32(res_scale) * out

    if pixel_shuffle is not None:
        # Fused PixelShuffle(r): (th, W, co*r*r) -> (th*r, W*r, co) in VMEM.
        r = pixel_shuffle
        w_dim = out.shape[1]
        co = out.shape[-1] // (r * r)
        out = out.reshape(th, w_dim, co, r, r)
        out = out.transpose(0, 3, 1, 4, 2).reshape(th * r, w_dim * r, co)
        o_ref[0] = out.astype(o_ref.dtype)
    elif out_nchw:
        # Lane-dense store for tiny Cout (RGB tail): write (Cout, th, W).
        o_ref[0] = jnp.transpose(out, (2, 0, 1)).astype(o_ref.dtype)
    else:
        o_ref[0] = out.astype(o_ref.dtype)


def _resblock_kernel(x_ref, xt_ref, xb_ref, w1_ref, b1_ref, w2_ref, b2_ref,
                     o_ref, *, res_scale, th, H, mxu_dtype):
    """Fused EDSR ResBlock: out = x + res_scale * conv2(relu(conv1(x))).

    The conv1 activation never leaves VMEM/vregs.  Needs a 2-row halo on each
    side, fetched as two (1, 2, W, C) blocks (th must be even).
    """
    i = pl.program_id(1)
    row0 = i * th

    mid = x_ref[0].astype(jnp.float32)            # (th, W, C)
    top = xt_ref[0].astype(jnp.float32)           # (2, W, C): rows row0-2, row0-1
    bot = xb_ref[0].astype(jnp.float32)           # (2, W, C): rows row0+th, +th+1

    tr = jax.lax.broadcasted_iota(jnp.int32, (2, 1, 1), 0) + (row0 - 2)
    top = jnp.where(tr >= 0, top, 0.0)
    br = jax.lax.broadcasted_iota(jnp.int32, (2, 1, 1), 0) + (row0 + th)
    bot = jnp.where(br <= H - 1, bot, 0.0)
    if H % th:
        rr = jax.lax.broadcasted_iota(jnp.int32, (th, 1, 1), 0) + row0
        mid = jnp.where(rr <= H - 1, mid, 0.0)

    x = jnp.concatenate([top, mid, bot], axis=0).astype(mxu_dtype)  # (th+4, W, C)

    # conv1 + ReLU over th+2 rows (global rows row0-1 .. row0+th).
    h = _conv3x3_tile(x, w1_ref[...], b1_ref[...].astype(jnp.float32), th + 2)
    h = jnp.maximum(h, 0.0)
    # conv2's own zero padding in H: rows of h outside the image must be zero.
    hr = jax.lax.broadcasted_iota(jnp.int32, (th + 2, 1, 1), 0) + (row0 - 1)
    h = jnp.where(jnp.logical_and(hr >= 0, hr <= H - 1), h, 0.0)

    h2 = _conv3x3_tile(h.astype(mxu_dtype), w2_ref[...],
                       b2_ref[...].astype(jnp.float32), th)
    o_ref[0] = (mid + jnp.float32(res_scale) * h2).astype(o_ref.dtype)


# ---------------------------------------------------------------------------
# Tiling / spec helpers
# ---------------------------------------------------------------------------
def _pick_row_tile(H, row_tile):
    """Even row tile (2-row halo blocks), preferring multiples of 8 (sublanes),
    with at least 2 row tiles when H allows (v7x has 2 TensorCores)."""
    th = max(2, min(int(row_tile), H))
    if H >= 4:
        th = min(th, -(-H // 2))       # ensure cdiv(H, th) >= 2
    if th >= 8:
        th -= th % 8
    th -= th % 2
    return max(2, th)


def _row_tile_cap(W, cin, cout, act_bytes, mxu_bytes, budget_bytes, *,
                  n_convs=1, has_skip=False):
    """Largest row tile whose per-step VMEM footprint fits budget_bytes.

    Footprint ~ double-buffered pipeline operands (input/skip/output tiles,
    weights, halos) + in-kernel intermediates that scale with th (f32 rows,
    one (rows, W, 3*Cin) im2col slab in the MXU dtype, the f32 accumulator
    and - for the fused ResBlock - the conv1 activation)."""
    fixed = 2 * n_convs * (9 * cin * cout * mxu_bytes + 256 * 4)    # weights+bias
    fixed += 2 * 4 * W * cin * act_bytes                            # halo blocks
    per_row = 2 * W * cin * act_bytes                               # x tile (x2 buf)
    per_row += 2 * W * cout * act_bytes                             # out tile (x2 buf)
    if has_skip:
        per_row += 2 * W * cout * act_bytes
    per_row += W * cin * (4 + mxu_bytes)        # f32 assembled rows + MXU cast
    per_row += 3 * W * cin * mxu_bytes          # one kw im2col slab
    per_row += W * cout * 4                     # f32 accumulator
    if n_convs == 2:
        per_row += W * cout * (4 + mxu_bytes)   # conv1 activation (+ cast)
    cap = (int(budget_bytes) - fixed) // max(per_row, 1)
    return int(max(2, min(cap, 512)))


def _halo1_spec(off, th, H, W, C):
    """One row at (clamped) global row i*th + off; masked in-kernel if outside."""
    return pl.BlockSpec(
        (1, 1, W, C), lambda n, i: (n, jnp.clip(i * th + off, 0, H - 1), 0, 0))


def _halo2_spec(off, th, H, W, C):
    """Two rows starting at (clamped) global row i*th + off.  off and th must
    be even so the 2-row block is aligned; outside rows are masked in-kernel."""
    max_blk = max(0, (H - 1) // 2)
    return pl.BlockSpec(
        (1, 2, W, C),
        lambda n, i: (n, jnp.clip((i * th + off) // 2, 0, max_blk), 0, 0))


def _prep_conv_weights(w, mxu_dtype):
    """HWIO (3, 3, Cin, Cout) -> (3[kw], 3*Cin[(kh, ci)], Cout) in MXU dtype."""
    kh, kw, cin, cout = w.shape
    assert kh == 3 and kw == 3
    return jnp.transpose(w, (1, 0, 2, 3)).reshape(kw, kh * cin, cout).astype(mxu_dtype)


# ---------------------------------------------------------------------------
# pallas_call wrappers
# ---------------------------------------------------------------------------
def conv3x3(x, w, b, *, apply_relu=False, skip=None, sub=None, res_scale=1.0,
            pixel_shuffle=None, out_nchw=False, row_tile=64, out_dtype=None,
            mxu_dtype=jnp.bfloat16, vmem_budget=_VMEM_TILE_BUDGET,
            vmem_limit=_VMEM_LIMIT_BYTES):
    """Row-tiled 3x3 'same' conv on an NHWC tensor.

    Optional fusions: per-channel input shift (`sub`, exact MeanShift), ReLU,
    residual add (`skip + res_scale * conv`), PixelShuffle(r) epilogue, and a
    lane-dense NCHW output layout (for tiny Cout, e.g. the RGB tail conv).
    """
    assert not (pixel_shuffle is not None and out_nchw)
    N, H, W, Cin = x.shape
    Cout = w.shape[-1]
    out_dtype = out_dtype if out_dtype is not None else x.dtype
    act_bytes = jnp.dtype(x.dtype).itemsize
    mxu_bytes = jnp.dtype(mxu_dtype).itemsize

    cap = _row_tile_cap(W, Cin, Cout, act_bytes, mxu_bytes, vmem_budget,
                        n_convs=1, has_skip=skip is not None)
    th = _pick_row_tile(H, min(int(row_tile), cap))
    nt = pl.cdiv(H, th)

    # Lane-dense NCHW store needs an (8, 128)-friendly (th, W) output block.
    nchw_fused = bool(out_nchw) and (th % 8 == 0 or th == H)

    wm = _prep_conv_weights(w, mxu_dtype)                    # (3, 3*Cin, Cout)
    bv = jnp.asarray(b, jnp.float32).reshape(1, Cout)

    kernel = functools.partial(
        _conv3x3_kernel, apply_relu=apply_relu, has_sub=sub is not None,
        has_skip=skip is not None, res_scale=float(res_scale), th=th, H=H,
        mxu_dtype=mxu_dtype,
        pixel_shuffle=None if pixel_shuffle is None else int(pixel_shuffle),
        out_nchw=nchw_fused)

    in_specs = [
        pl.BlockSpec((1, th, W, Cin), lambda n, i: (n, i, 0, 0)),
        _halo1_spec(-1, th, H, W, Cin),
        _halo1_spec(th, th, H, W, Cin),
        # TODO(synk): on v7x mark the two constant-index specs below with
        # pipeline_mode=pl.Buffered(1) so the weights are not double-buffered.
        pl.BlockSpec((3, 3 * Cin, Cout), lambda n, i: (0, 0, 0)),
        pl.BlockSpec((1, Cout), lambda n, i: (0, 0)),
    ]
    args = [x, x, x, wm, bv]
    if sub is not None:
        in_specs.append(pl.BlockSpec((1, Cin), lambda n, i: (0, 0)))
        args.append(jnp.asarray(sub, jnp.float32).reshape(1, Cin))
    if skip is not None:
        in_specs.append(pl.BlockSpec((1, th, W, Cout), lambda n, i: (n, i, 0, 0)))
        args.append(skip)

    if pixel_shuffle is not None:
        r = int(pixel_shuffle)
        co = Cout // (r * r)
        assert co * r * r == Cout
        out_shape = jax.ShapeDtypeStruct((N, H * r, W * r, co), out_dtype)
        out_spec = pl.BlockSpec((1, th * r, W * r, co), lambda n, i: (n, i, 0, 0))
    elif nchw_fused:
        out_shape = jax.ShapeDtypeStruct((N, Cout, H, W), out_dtype)
        out_spec = pl.BlockSpec((1, Cout, th, W), lambda n, i: (n, 0, i, 0))
    else:
        out_shape = jax.ShapeDtypeStruct((N, H, W, Cout), out_dtype)
        out_spec = pl.BlockSpec((1, th, W, Cout), lambda n, i: (n, i, 0, 0))

    # TODO(synk): add a W (column) grid axis with 1-column halos for production
    # widths (W~2K, n_feats=256) so th can stay large within the VMEM budget.
    flops = 2 * N * H * W * 9 * Cin * Cout
    bytes_accessed = (N * H * W * (Cin + Cout) * act_bytes
                      + (N * H * W * Cout * act_bytes if skip is not None else 0)
                      + 9 * Cin * Cout * mxu_bytes)

    y = pl.pallas_call(
        kernel,
        out_shape=out_shape,
        grid=(N, nt),
        in_specs=in_specs,
        out_specs=out_spec,
        compiler_params=pltpu.CompilerParams(
            dimension_semantics=("parallel", "parallel"),
            vmem_limit_bytes=int(vmem_limit)),
        cost_estimate=pl.CostEstimate(flops=int(flops), transcendentals=0,
                                      bytes_accessed=int(bytes_accessed)),
    )(*args)

    if out_nchw and not nchw_fused:
        y = jnp.transpose(y, (0, 3, 1, 2))      # fallback: NHWC store + transpose
    return y


def resblock(x, w1, b1, w2, b2, *, res_scale=1.0, row_tile=64, out_dtype=None,
             mxu_dtype=jnp.bfloat16, vmem_budget=_VMEM_TILE_BUDGET,
             vmem_limit=_VMEM_LIMIT_BYTES):
    """Fused EDSR ResBlock (conv + ReLU + conv + skip) as a single pallas_call."""
    N, H, W, C = x.shape
    out_dtype = out_dtype if out_dtype is not None else x.dtype
    act_bytes = jnp.dtype(x.dtype).itemsize
    mxu_bytes = jnp.dtype(mxu_dtype).itemsize

    cap = _row_tile_cap(W, C, C, act_bytes, mxu_bytes, vmem_budget, n_convs=2)
    th = _pick_row_tile(H, min(int(row_tile), cap))
    nt = pl.cdiv(H, th)

    # TODO(synk): optional fp8 body weights on v7x (per-out-channel scales),
    # gated on a PSNR check; keep head/tail in bf16.
    w1m = _prep_conv_weights(w1, mxu_dtype)
    w2m = _prep_conv_weights(w2, mxu_dtype)
    b1v = jnp.asarray(b1, jnp.float32).reshape(1, C)
    b2v = jnp.asarray(b2, jnp.float32).reshape(1, C)

    kernel = functools.partial(_resblock_kernel, res_scale=float(res_scale),
                               th=th, H=H, mxu_dtype=mxu_dtype)

    in_specs = [
        pl.BlockSpec((1, th, W, C), lambda n, i: (n, i, 0, 0)),
        _halo2_spec(-2, th, H, W, C),
        _halo2_spec(th, th, H, W, C),
        pl.BlockSpec((3, 3 * C, C), lambda n, i: (0, 0, 0)),
        pl.BlockSpec((1, C), lambda n, i: (0, 0)),
        pl.BlockSpec((3, 3 * C, C), lambda n, i: (0, 0, 0)),
        pl.BlockSpec((1, C), lambda n, i: (0, 0)),
    ]
    flops = 2 * 2 * N * H * W * 9 * C * C
    bytes_accessed = 2 * N * H * W * C * act_bytes + 2 * 9 * C * C * mxu_bytes

    return pl.pallas_call(
        kernel,
        out_shape=jax.ShapeDtypeStruct((N, H, W, C), out_dtype),
        grid=(N, nt),
        in_specs=in_specs,
        out_specs=pl.BlockSpec((1, th, W, C), lambda n, i: (n, i, 0, 0)),
        compiler_params=pltpu.CompilerParams(
            dimension_semantics=("parallel", "parallel"),
            vmem_limit_bytes=int(vmem_limit)),
        cost_estimate=pl.CostEstimate(flops=int(flops), transcendentals=0,
                                      bytes_accessed=int(bytes_accessed)),
    )(x, x, x, w1m, b1v, w2m, b2v)


def pixel_shuffle_nhwc(x, r):
    """torch.nn.PixelShuffle semantics in NHWC (used by the JAX reference)."""
    N, H, W, C = x.shape
    Co = C // (r * r)
    x = x.reshape(N, H, W, Co, r, r)
    x = x.transpose(0, 1, 4, 2, 5, 3)
    return x.reshape(N, H * r, W * r, Co)


# ---------------------------------------------------------------------------
# Parameter init (deterministic, synthetic)
# ---------------------------------------------------------------------------
def _conv_init(key, cin, cout):
    kw, kb = jax.random.split(key)
    w = jax.random.normal(kw, (3, 3, cin, cout), jnp.float32) / math.sqrt(9 * cin)
    b = jax.random.normal(kb, (cout,), jnp.float32) * 0.01
    return w, b


def init_edsr_params(key, n_resblocks, n_feats, n_colors, scale):
    n_up = int(math.log2(scale)) if (scale & (scale - 1)) == 0 else 1
    keys = jax.random.split(key, 4 + 2 * n_resblocks + n_up)
    it = iter(keys)
    params = {}
    params["head"] = _conv_init(next(it), n_colors, n_feats)
    params["body_blocks"] = [
        (_conv_init(next(it), n_feats, n_feats),
         _conv_init(next(it), n_feats, n_feats))
        for _ in range(n_resblocks)
    ]
    params["body_conv"] = _conv_init(next(it), n_feats, n_feats)
    if (scale & (scale - 1)) == 0:       # power of 2: log2(scale) x (conv + PS(2))
        params["tail_up"] = [_conv_init(next(it), n_feats, 4 * n_feats)
                             for _ in range(n_up)]
    elif scale == 3:
        params["tail_up"] = [_conv_init(next(it), n_feats, 9 * n_feats)]
    else:
        raise ValueError("scale must be power of 2 or 3")
    params["tail_conv"] = _conv_init(next(it), n_feats, n_colors)
    return params


# ---------------------------------------------------------------------------
# EDSR forward (Pallas) and pure-JAX reference
# ---------------------------------------------------------------------------
def edsr_forward_pallas(x_nchw, params, *, rgb_range=255, scale=4, res_scale=1.0,
                        row_tile=64, mxu_dtype=jnp.bfloat16):
    rgb_mean = (0.4488, 0.4371, 0.4040)
    act_dtype = (jnp.bfloat16
                 if jnp.dtype(mxu_dtype) == jnp.dtype(jnp.bfloat16)
                 else jnp.float32)

    x = jnp.transpose(x_nchw, (0, 2, 3, 1)).astype(jnp.float32)   # NCHW -> NHWC
    n_colors = x.shape[-1]

    # Head conv with sub_mean fused (exact: applied before the zero padding).
    sub = jnp.asarray([rgb_range * m for m in rgb_mean], jnp.float32)
    wh, bh = params["head"]
    x = conv3x3(x, wh, bh, sub=sub, row_tile=row_tile, out_dtype=act_dtype,
                mxu_dtype=mxu_dtype)
    head_out = x

    res = x
    for (w1, b1), (w2, b2) in params["body_blocks"]:              # fused ResBlocks
        res = resblock(res, w1, b1, w2, b2, res_scale=res_scale,
                       row_tile=row_tile, out_dtype=act_dtype,
                       mxu_dtype=mxu_dtype)
    # Final body conv fused with the outer skip "res += x".
    wb, bb = params["body_conv"]
    res = conv3x3(res, wb, bb, skip=head_out, res_scale=1.0, row_tile=row_tile,
                  out_dtype=act_dtype, mxu_dtype=mxu_dtype)
    x = res

    # Upsampler: conv + fused PixelShuffle per stage.
    r = 2 if (scale & (scale - 1)) == 0 else 3
    for (w, b) in params["tail_up"]:
        x = conv3x3(x, w, b, pixel_shuffle=r, row_tile=row_tile,
                    out_dtype=act_dtype, mxu_dtype=mxu_dtype)

    # Tail conv: add_mean folded into the bias (exact); lane-dense NCHW store.
    wt, bt = params["tail_conv"]
    bt_folded = jnp.asarray(bt, jnp.float32) + rgb_range * jnp.asarray(
        rgb_mean, jnp.float32)
    x = conv3x3(x, wt, bt_folded, out_nchw=True, row_tile=row_tile,
                out_dtype=jnp.float32, mxu_dtype=mxu_dtype)
    return x                                                      # NCHW


def _ref_conv(x, w, b):
    y = jax.lax.conv_general_dilated(
        x, w, (1, 1), "SAME", dimension_numbers=("NHWC", "HWIO", "NHWC"))
    return y + b.reshape(1, 1, 1, -1)


def edsr_forward_ref(x_nchw, params, *, rgb_range=255, scale=4, res_scale=1.0):
    rgb_mean = jnp.array([0.4488, 0.4371, 0.4040], jnp.float32)
    x = jnp.transpose(x_nchw, (0, 2, 3, 1)).astype(jnp.float32)
    x = x - rgb_range * rgb_mean                                  # sub_mean
    x = _ref_conv(x, *params["head"])
    head_out = x
    res = x
    for (w1, b1), (w2, b2) in params["body_blocks"]:
        t = jnp.maximum(_ref_conv(res, w1, b1), 0.0)
        res = res + res_scale * _ref_conv(t, w2, b2)
    res = head_out + _ref_conv(res, *params["body_conv"])
    x = res
    r = 2 if (scale & (scale - 1)) == 0 else 3
    for (w, b) in params["tail_up"]:
        x = pixel_shuffle_nhwc(_ref_conv(x, w, b), r)
    x = _ref_conv(x, *params["tail_conv"])
    x = x + rgb_range * rgb_mean                                  # add_mean
    return jnp.transpose(x, (0, 3, 1, 2))


# ---------------------------------------------------------------------------
if __name__ == "__main__":
    key = jax.random.PRNGKey(0)
    kx, kp = jax.random.split(key)

    # Small EDSR config (the module accepts these hyperparameters).
    N, n_colors, Hin, Win = 2, 3, 16, 16
    n_resblocks, n_feats, scale, rgb_range, res_scale = 2, 8, 4, 255, 1.0

    x = jax.random.uniform(kx, (N, n_colors, Hin, Win), jnp.float32) * rgb_range
    params = init_edsr_params(kp, n_resblocks, n_feats, n_colors, scale)

    ref = jax.block_until_ready(
        edsr_forward_ref(x, params, rgb_range=rgb_range, scale=scale,
                         res_scale=res_scale))

    # 1) f32-MXU path, even row tiling -> tight check of halo/tiling/fusion.
    out_f32 = jax.block_until_ready(
        edsr_forward_pallas(x, params, rgb_range=rgb_range, scale=scale,
                            res_scale=res_scale, row_tile=8,
                            mxu_dtype=jnp.float32))
    assert out_f32.shape == (N, n_colors, Hin * scale, Win * scale), out_f32.shape
    assert jnp.allclose(out_f32, ref, rtol=1e-3, atol=5e-2), \
        float(jnp.max(jnp.abs(out_f32 - ref)))

    # 2) f32-MXU path with a row tile that does NOT divide H -> exercises the
    #    masked partial tail tile and the NHWC fallback for the tail store.
    out_uneven = jax.block_until_ready(
        edsr_forward_pallas(x, params, rgb_range=rgb_range, scale=scale,
                            res_scale=res_scale, row_tile=6,
                            mxu_dtype=jnp.float32))
    assert jnp.allclose(out_uneven, ref, rtol=1e-3, atol=5e-2), \
        float(jnp.max(jnp.abs(out_uneven - ref)))

    # 3) bf16-MXU path (the performance configuration) -> loose check.
    out_bf16 = jax.block_until_ready(
        edsr_forward_pallas(x, params, rgb_range=rgb_range, scale=scale,
                            res_scale=res_scale, row_tile=8,
                            mxu_dtype=jnp.bfloat16))
    assert out_bf16.shape == (N, n_colors, Hin * scale, Win * scale)
    err = float(jnp.max(jnp.abs(out_bf16 - ref)))
    ref_scale = float(jnp.max(jnp.abs(ref)))
    assert err <= 6e-2 * ref_scale + 1.0, (err, ref_scale)

    print("KERNEL_OK")
</pallas_src>

<mosaic_0001>
module attributes {stable_mosaic.version = 11 : i64} {
  func.func @_conv3x3_kernel(%arg0: i32, %arg1: i32, %arg2: memref<1x8x16x3xf32, #tpu.memory_space<vmem>>, %arg3: memref<1x1x16x3xf32, #tpu.memory_space<vmem>>, %arg4: memref<1x1x16x3xf32, #tpu.memory_space<vmem>>, %arg5: memref<3x9x8xf32, #tpu.memory_space<vmem>>, %arg6: memref<1x8xf32, #tpu.memory_space<vmem>>, %arg7: memref<1x3xf32, #tpu.memory_space<vmem>>, %arg8: memref<1x8x16x8xf32, #tpu.memory_space<vmem>>) attributes {dimension_semantics = [#tpu.dimension_semantics<parallel>, #tpu.dimension_semantics<parallel>], iteration_bounds = array<i64: 2, 2>, scalar_prefetch = 0 : i64, scratch_operands = 0 : i64, tpu.core_type = #tpu.core_type<tc>, window_params = [{transform_indices = @transform_0, window_bounds = array<i64: 1, 8, 16, 3>}, {transform_indices = @transform_1, window_bounds = array<i64: 1, 1, 16, 3>}, {transform_indices = @transform_2, window_bounds = array<i64: 1, 1, 16, 3>}, {pipeline_mode = #tpu.pipeline_mode<synchronous>, transform_indices = @transform_3, window_bounds = array<i64: 3, 9, 8>}, {pipeline_mode = #tpu.pipeline_mode<synchronous>, transform_indices = @transform_4, window_bounds = array<i64: 1, 8>}, {pipeline_mode = #tpu.pipeline_mode<synchronous>, transform_indices = @transform_5, window_bounds = array<i64: 1, 3>}, {transform_indices = @transform_6, window_bounds = array<i64: 1, 8, 16, 8>}]} {
    %c8_i32 = arith.constant 8 : i32
    %0 = arith.muli %arg1, %c8_i32 : i32
    %c0 = arith.constant 0 : index
    %c0_0 = arith.constant 0 : index
    %c0_1 = arith.constant 0 : index
    %c0_2 = arith.constant 0 : index
    %1 = vector.load %arg2[%c0, %c0_0, %c0_1, %c0_2] : memref<1x8x16x3xf32, #tpu.memory_space<vmem>>, vector<1x8x16x3xf32>
    %2 = vector.shape_cast %1 : vector<1x8x16x3xf32> to vector<8x16x3xf32>
    %c0_3 = arith.constant 0 : index
    %c0_4 = arith.constant 0 : index
    %c0_5 = arith.constant 0 : index
    %c0_6 = arith.constant 0 : index
    %3 = vector.load %arg3[%c0_3, %c0_4, %c0_5, %c0_6] : memref<1x1x16x3xf32, #tpu.memory_space<vmem>>, vector<1x1x16x3xf32>
    %4 = vector.shape_cast %3 : vector<1x1x16x3xf32> to vector<16x3xf32>
    %c0_7 = arith.constant 0 : index
    %c0_8 = arith.constant 0 : index
    %c0_9 = arith.constant 0 : index
    %c0_10 = arith.constant 0 : index
    %5 = vector.load %arg4[%c0_7, %c0_8, %c0_9, %c0_10] : memref<1x1x16x3xf32, #tpu.memory_space<vmem>>, vector<1x1x16x3xf32>
    %6 = vector.shape_cast %5 : vector<1x1x16x3xf32> to vector<16x3xf32>
    %c0_11 = arith.constant 0 : index
    %c0_12 = arith.constant 0 : index
    %7 = vector.load %arg7[%c0_11, %c0_12] : memref<1x3xf32, #tpu.memory_space<vmem>>, vector<1x3xf32>
    %8 = vector.shape_cast %7 : vector<1x3xf32> to vector<3xf32>
    %9 = vector.shape_cast %8 : vector<3xf32> to vector<1x1x3xf32>
    %10 = vector.broadcast %9 : vector<1x1x3xf32> to vector<8x16x3xf32>
    %11 = arith.subf %2, %10 : vector<8x16x3xf32>
    %12 = vector.shape_cast %8 : vector<3xf32> to vector<1x3xf32>
    %13 = vector.broadcast %12 : vector<1x3xf32> to vector<16x3xf32>
    %14 = arith.subf %4, %13 : vector<16x3xf32>
    %15 = vector.shape_cast %8 : vector<3xf32> to vector<1x3xf32>
    %16 = vector.broadcast %15 : vector<1x3xf32> to vector<16x3xf32>
    %17 = arith.subf %6, %16 : vector<16x3xf32>
    %c1_i32 = arith.constant 1 : i32
    %18 = arith.subi %0, %c1_i32 : i32
    %c0_i32 = arith.constant 0 : i32
    %19 = arith.cmpi sge, %18, %c0_i32 : i32
    %cst = arith.constant 0.000000e+00 : f32
    %20 = vector.broadcast %cst : f32 to vector<16x3xf32>
    %21 = arith.select %19, %14, %20 : vector<16x3xf32>
    %c8_i32_13 = arith.constant 8 : i32
    %22 = arith.addi %0, %c8_i32_13 : i32
    %c15_i32 = arith.constant 15 : i32
    %23 = arith.cmpi sle, %22, %c15_i32 : i32
    %cst_14 = arith.constant 0.000000e+00 : f32
    %24 = vector.broadcast %cst_14 : f32 to vector<16x3xf32>
    %25 = arith.select %23, %17, %24 : vector<16x3xf32>
    %26 = vector.shape_cast %21 : vector<16x3xf32> to vector<1x16x3xf32>
    %27 = vector.shape_cast %25 : vector<16x3xf32> to vector<1x16x3xf32>
    %28 = tpu.concatenate %26, %11, %27 in 0 : vector<1x16x3xf32>, vector<8x16x3xf32>, vector<1x16x3xf32> -> vector<10x16x3xf32>
    %c0_15 = arith.constant 0 : index
    %c0_16 = arith.constant 0 : index
    %c0_17 = arith.constant 0 : index
    %29 = vector.load %arg5[%c0_15, %c0_16, %c0_17] : memref<3x9x8xf32, #tpu.memory_space<vmem>>, vector<3x9x8xf32>
    %c0_18 = arith.constant 0 : index
    %c0_19 = arith.constant 0 : index
    %30 = vector.load %arg6[%c0_18, %c0_19] : memref<1x8xf32, #tpu.memory_space<vmem>>, vector<1x8xf32>
    %cst_20 = arith.constant 0.000000e+00 : f32
    %31 = vector.broadcast %cst_20 : f32 to vector<128x8xf32>
    %cst_21 = arith.constant 0.000000e+00 : f32
    %32 = vector.broadcast %cst_21 : f32 to vector<10x1x3xf32>
    %33 = vector.extract_strided_slice %28 {offsets = [0, 0, 0], sizes = [10, 15, 3], strides = [1, 1, 1]} : vector<10x16x3xf32> to vector<10x15x3xf32>
    %34 = tpu.concatenate %32, %33 in 1 : vector<10x1x3xf32>, vector<10x15x3xf32> -> vector<10x16x3xf32>
    %35 = vector.extract_strided_slice %34 {offsets = [0, 0, 0], sizes = [8, 16, 3], strides = [1, 1, 1]} : vector<10x16x3xf32> to vector<8x16x3xf32>
    %36 = vector.extract_strided_slice %34 {offsets = [1, 0, 0], sizes = [8, 16, 3], strides = [1, 1, 1]} : vector<10x16x3xf32> to vector<8x16x3xf32>
    %37 = vector.extract_strided_slice %34 {offsets = [2, 0, 0], sizes = [8, 16, 3], strides = [1, 1, 1]} : vector<10x16x3xf32> to vector<8x16x3xf32>
    %38 = tpu.concatenate %35, %36, %37 in 2 : vector<8x16x3xf32>, vector<8x16x3xf32>, vector<8x16x3xf32> -> vector<8x16x9xf32>
    %39 = vector.shape_cast %38 : vector<8x16x9xf32> to vector<128x9xf32>
    %40 = vector.extract_strided_slice %29 {offsets = [0, 0, 0], sizes = [1, 9, 8], strides = [1, 1, 1]} : vector<3x9x8xf32> to vector<1x9x8xf32>
    %41 = vector.shape_cast %40 : vector<1x9x8xf32> to vector<9x8xf32>
    %cst_22 = arith.constant dense<0.000000e+00> : vector<128x8xf32>
    %42 = tpu.matmul %39, %41, %cst_22 {dimension_numbers = #tpu.dot_dimension_numbers<[1], [0], [0], [1], [0, 0, 1, 1], [], []>} : vector<128x9xf32>, vector<9x8xf32>, vector<128x8xf32> -> vector<128x8xf32>
    %43 = arith.addf %31, %42 : vector<128x8xf32>
    %44 = vector.extract_strided_slice %28 {offsets = [0, 0, 0], sizes = [8, 16, 3], strides = [1, 1, 1]} : vector<10x16x3xf32> to vector<8x16x3xf32>
    %45 = vector.extract_strided_slice %28 {offsets = [1, 0, 0], sizes = [8, 16, 3], strides = [1, 1, 1]} : vector<10x16x3xf32> to vector<8x16x3xf32>
    %46 = vector.extract_strided_slice %28 {offsets = [2, 0, 0], sizes = [8, 16, 3], strides = [1, 1, 1]} : vector<10x16x3xf32> to vector<8x16x3xf32>
    %47 = tpu.concatenate %44, %45, %46 in 2 : vector<8x16x3xf32>, vector<8x16x3xf32>, vector<8x16x3xf32> -> vector<8x16x9xf32>
    %48 = vector.shape_cast %47 : vector<8x16x9xf32> to vector<128x9xf32>
    %49 = vector.extract_strided_slice %29 {offsets = [1, 0, 0], sizes = [1, 9, 8], strides = [1, 1, 1]} : vector<3x9x8xf32> to vector<1x9x8xf32>
    %50 = vector.shape_cast %49 : vector<1x9x8xf32> to vector<9x8xf32>
    %cst_23 = arith.constant dense<0.000000e+00> : vector<128x8xf32>
    %51 = tpu.matmul %48, %50, %cst_23 {dimension_numbers = #tpu.dot_dimension_numbers<[1], [0], [0], [1], [0, 0, 1, 1], [], []>} : vector<128x9xf32>, vector<9x8xf32>, vector<128x8xf32> -> vector<128x8xf32>
    %52 = arith.addf %43, %51 : vector<128x8xf32>
    %cst_24 = arith.constant 0.000000e+00 : f32
    %53 = vector.broadcast %cst_24 : f32 to vector<10x1x3xf32>
    %54 = vector.extract_strided_slice %28 {offsets = [0, 1, 0], sizes = [10, 15, 3], strides = [1, 1, 1]} : vector<10x16x3xf32> to vector<10x15x3xf32>
    %55 = tpu.concatenate %54, %53 in 1 : vector<10x15x3xf32>, vector<10x1x3xf32> -> vector<10x16x3xf32>
    %56 = vector.extract_strided_slice %55 {offsets = [0, 0, 0], sizes = [8, 16, 3], strides = [1, 1, 1]} : vector<10x16x3xf32> to vector<8x16x3xf32>
    %57 = vector.extract_strided_slice %55 {offsets = [1, 0, 0], sizes = [8, 16, 3], strides = [1, 1, 1]} : vector<10x16x3xf32> to vector<8x16x3xf32>
    %58 = vector.extract_strided_slice %55 {offsets = [2, 0, 0], sizes = [8, 16, 3], strides = [1, 1, 1]} : vector<10x16x3xf32> to vector<8x16x3xf32>
    %59 = tpu.concatenate %56, %57, %58 in 2 : vector<8x16x3xf32>, vector<8x16x3xf32>, vector<8x16x3xf32> -> vector<8x16x9xf32>
    %60 = vector.shape_cast %59 : vector<8x16x9xf32> to vector<128x9xf32>
    %61 = vector.extract_strided_slice %29 {offsets = [2, 0, 0], sizes = [1, 9, 8], strides = [1, 1, 1]} : vector<3x9x8xf32> to vector<1x9x8xf32>
    %62 = vector.shape_cast %61 : vector<1x9x8xf32> to vector<9x8xf32>
    %cst_25 = arith.constant dense<0.000000e+00> : vector<128x8xf32>
    %63 = tpu.matmul %60, %62, %cst_25 {dimension_numbers = #tpu.dot_dimension_numbers<[1], [0], [0], [1], [0, 0, 1, 1], [], []>} : vector<128x9xf32>, vector<9x8xf32>, vector<128x8xf32> -> vector<128x8xf32>
    %64 = arith.addf %52, %63 : vector<128x8xf32>
    %65 = vector.broadcast %30 : vector<1x8xf32> to vector<128x8xf32>
    %66 = arith.addf %64, %65 : vector<128x8xf32>
    %67 = vector.shape_cast %66 : vector<128x8xf32> to vector<8x16x8xf32>
    %c0_26 = arith.constant 0 : index
    %c0_27 = arith.constant 0 : index
    %c0_28 = arith.constant 0 : index
    %c0_29 = arith.constant 0 : index
    %68 = vector.load %arg8[%c0_26, %c0_27, %c0_28, %c0_29] : memref<1x8x16x8xf32, #tpu.memory_space<vmem>>, vector<1x8x16x8xf32>
    %69 = vector.shape_cast %68 : vector<1x8x16x8xf32> to vector<8x16x8xf32>
    %70 = vector.shape_cast %67 : vector<8x16x8xf32> to vector<1x8x16x8xf32>
    tpu.vector_store %arg8[%c0_26, %c0_27, %c0_28, %c0_29], %70 {strides = array<i32>} : memref<1x8x16x8xf32, #tpu.memory_space<vmem>>, vector<1x8x16x8xf32>,
    return
  }
  func.func @transform_0(%arg0: i32, %arg1: i32) -> (i32, i32, i32, i32) {
    %c0_i32 = arith.constant 0 : i32
    %c0_i32_0 = arith.constant 0 : i32
    %c0_i32_1 = arith.constant 0 : i32
    return %arg0, %arg1, %c0_i32, %c0_i32_0 : i32, i32, i32, i32
  }
  func.func @transform_1(%arg0: i32, %arg1: i32) -> (i32, i32, i32, i32) {
    %c8_i32 = arith.constant 8 : i32
    %0 = arith.muli %arg1, %c8_i32 : i32
    %c-1_i32 = arith.constant -1 : i32
    %1 = arith.addi %0, %c-1_i32 : i32
    %c0_i32 = arith.constant 0 : i32
    %c15_i32 = arith.constant 15 : i32
    %2 = arith.maxsi %c0_i32, %1 : i32
    %3 = arith.minsi %c15_i32, %2 : i32
    %c0_i32_0 = arith.constant 0 : i32
    %c0_i32_1 = arith.constant 0 : i32
    %c0_i32_2 = arith.constant 0 : i32
    return %arg0, %3, %c0_i32_0, %c0_i32_1 : i32, i32, i32, i32
  }
  func.func @transform_2(%arg0: i32, %arg1: i32) -> (i32, i32, i32, i32) {
    %c8_i32 = arith.constant 8 : i32
    %0 = arith.muli %arg1, %c8_i32 : i32
    %c8_i32_0 = arith.constant 8 : i32
    %1 = arith.addi %0, %c8_i32_0 : i32
    %c0_i32 = arith.constant 0 : i32
    %c15_i32 = arith.constant 15 : i32
    %2 = arith.maxsi %c0_i32, %1 : i32
    %3 = arith.minsi %c15_i32, %2 : i32
    %c0_i32_1 = arith.constant 0 : i32
    %c0_i32_2 = arith.constant 0 : i32
    %c0_i32_3 = arith.constant 0 : i32
    return %arg0, %3, %c0_i32_1, %c0_i32_2 : i32, i32, i32, i32
  }
  func.func @transform_3(%arg0: i32, %arg1: i32) -> (i32, i32, i32) {
    %c0_i32 = arith.constant 0 : i32
    %c0_i32_0 = arith.constant 0 : i32
    %c0_i32_1 = arith.constant 0 : i32
    %c0_i32_2 = arith.constant 0 : i32
    return %c0_i32, %c0_i32_0, %c0_i32_1 : i32, i32, i32
  }
  func.func @transform_4(%arg0: i32, %arg1: i32) -> (i32, i32) {
    %c0_i32 = arith.constant 0 : i32
    %c0_i32_0 = arith.constant 0 : i32
    %c0_i32_1 = arith.constant 0 : i32
    return %c0_i32, %c0_i32_0 : i32, i32
  }
  func.func @transform_5(%arg0: i32, %arg1: i32) -> (i32, i32) {
    %c0_i32 = arith.constant 0 : i32
    %c0_i32_0 = arith.constant 0 : i32
    %c0_i32_1 = arith.constant 0 : i32
    return %c0_i32, %c0_i32_0 : i32, i32
  }
  func.func @transform_6(%arg0: i32, %arg1: i32) -> (i32, i32, i32, i32) {
    %c0_i32 = arith.constant 0 : i32
    %c0_i32_0 = arith.constant 0 : i32
    %c0_i32_1 = arith.constant 0 : i32
    return %arg0, %arg1, %c0_i32, %c0_i32_0 : i32, i32, i32, i32
  }
}

</mosaic_0001>

<llo_original>
// kernel: tpu_custom_call.1
$region0: #{tpu_custom_call.1}
  #allocation0 [shape = 'u32[]', space=smem, size = 0x4, offset = 0x4, fixed_abs, tag = 'smem constant byte address 0x4 - core index']
  #allocation1 [shape = 'u32[72,128]{1,0:T(1,128)}', space=vmem, size = 0x9000, scoped, tag = 'internal scratch']
  %s0 = inlined_call_operand.vmem [shape: f32[2,16,16,3], index: 0, kind: input, shape index: {}]
  %s1 = inlined_call_operand.vmem [shape: f32[2,16,16,3], index: 1, kind: input, shape index: {}]
  %s2 = inlined_call_operand.vmem [shape: f32[2,16,16,3], index: 2, kind: input, shape index: {}]
  %s3 = inlined_call_operand.vmem [shape: f32[3,9,8], index: 3, kind: input, shape index: {}]
  %s4 = inlined_call_operand.vmem [shape: f32[1,8], index: 4, kind: input, shape index: {}]
  %s5 = inlined_call_operand.vmem [shape: f32[1,3], index: 5, kind: input, shape index: {}]
  %s6 = inlined_call_operand.vmem [shape: f32[2,16,16,8], index: 6, kind: output, shape index: {}]
  %s7 = sld [smem:[#allocation0]]
  $region57: #{tpu_custom_call.1} parent=0
    _
  %s9 = ssub.s32 1, %s7
  %s10 = scalar_select 0, %s9, %s7
  loop: start=0, step=1, limit=6
  $region2: #{tpu_custom_call.1} parent=0 // loop_pre_header
    _
  $region3: #{tpu_custom_call.1} parent=0 // loop_header
    %s12 = sphi 0, %s16
    %p13 = scmp.ge.s32.totalorder %s12, 6
    %s19 = sphi 0, %s31
    %s20 = sphi 0, %s27
    %s21 = sphi 0, %s19
    %s22 = sphi 0, %s20
    %s23 = sphi 0, %s21
    %s24 = sphi 0, %s22
    %s36 = sphi 0, %s38
    %s39 = sphi 0, %s36
    %s40 = sphi 0, %s39
    %s56 = sphi 0, %s40
    %s76 = sphi 0, %s78
    %s79 = sphi 0, %s76
    %s80 = sphi 0, %s79
    %s96 = sphi 0, %s80
    %s116 = sphi 0, %s118
    %s119 = sphi 0, %s116
    %s120 = sphi 0, %s119
    %s136 = sphi 0, %s120
    %s140 = sphi 0, %s140
    %s142 = sphi 0, %s140
    %s143 = sphi 0, %s142
    %s157 = sphi 0, %s143
    %s161 = sphi 0, %s161
    %s163 = sphi 0, %s161
    %s164 = sphi 0, %s163
    %s178 = sphi 0, %s164
    %s182 = sphi 0, %s182
    %s184 = sphi 0, %s182
    %s185 = sphi 0, %s184
    %s199 = sphi 0, %s185
    %s207 = sphi 0, %s209
    %s210 = sphi 0, %s207
    %s211 = sphi 0, %s210
    %s227 = sphi 0, %s211
  $region4: #{tpu_custom_call.1} parent=0 // loop_header_branch
    %15 = sbr.rel (%p13) target = $region8
  $region5: #{tpu_custom_call.1} parent=0 // loop_body
    %s17 = ssub.s32 %s12, 1
    %s18 = ssub.s32 %s12, 2
    %s25 = sadd.s32 1, %s20
    %p26 = scmp.ge.s32.totalorder %s25, 2
    %s27 = scalar_select %p26, 0, %s25
    %s28 = sadd.s32 1, %s19
    %s29 = scalar_select %p26, %s28, %s19
    %p30 = scmp.ge.s32.totalorder %s29, 2
    %s31 = scalar_select %p30, 0, %s29
    %s32 = ssub.s32 %s19, %s31
    %s33 = ssub.s32 %s20, %s27
    %s34 = sor.u32 %s32, %s33
    %p35 = scmp.eq.s32.totalorder %s34, 0
    %s37 = sadd.s32 %s36, 1
    %s38 = scalar_select %p35, %s36, %s37
    %p41 = pneg %p35
    %p42 = scmp.eq.s32.totalorder %s12, 3
    %p43 = por %p41, %p42
    %p44 = scmp.ne.s32.totalorder %s36, %s39
    %p45 = scmp.eq.s32.totalorder %s12, 0
    %p46 = por %p44, %p45
    %p47 = scmp.ne.s32.totalorder %s36, %s39
    %p48 = scmp.eq.s32.totalorder %s17, 3
    %p49 = por %p47, %p48
    %p50 = scmp.ne.s32.totalorder %s39, %s40
    %p51 = scmp.eq.s32.totalorder %s17, 0
    %p52 = por %p50, %p51
    %p53 = scmp.ne.s32.totalorder %s39, %s40
    %p54 = scmp.eq.s32.totalorder %s18, 3
    %p55 = por %p53, %p54
    %p57 = scmp.ne.s32.totalorder %s40, %s56
    %p58 = scmp.eq.s32.totalorder %s18, 0
    %p59 = por %p57, %p58
    %s60 = smul.u32 %s20, 8
    %s61 = sadd.s32 %s60, 4294967295
    %p62 = scmp.gt.s32.totalorder %s61, 0
    %s63 = scalar_select %p62, %s61, 0
    %p64 = scmp.lt.s32.totalorder %s63, 15
    %s65 = scalar_select %p64, %s63, 15
    %s66 = smul.u32 %s27, 8
    %s67 = sadd.s32 %s66, 4294967295
    %p68 = scmp.gt.s32.totalorder %s67, 0
    %s69 = scalar_select %p68, %s67, 0
    %p70 = scmp.lt.s32.totalorder %s69, 15
    %s71 = scalar_select %p70, %s69, 15
    %s72 = ssub.s32 %s19, %s31
    %s73 = ssub.s32 %s65, %s71
    %s74 = sor.u32 %s72, %s73
    %p75 = scmp.eq.s32.totalorder %s74, 0
    %s77 = sadd.s32 %s76, 1
    %s78 = scalar_select %p75, %s76, %s77
    %p81 = pneg %p75
    %p82 = scmp.eq.s32.totalorder %s12, 3
    %p83 = por %p81, %p82
    %p84 = scmp.ne.s32.totalorder %s76, %s79
    %p85 = scmp.eq.s32.totalorder %s12, 0
    %p86 = por %p84, %p85
    %p87 = scmp.ne.s32.totalorder %s76, %s79
    %p88 = scmp.eq.s32.totalorder %s17, 3
    %p89 = por %p87, %p88
    %p90 = scmp.ne.s32.totalorder %s79, %s80
    %p91 = scmp.eq.s32.totalorder %s17, 0
    %p92 = por %p90, %p91
    %p93 = scmp.ne.s32.totalorder %s79, %s80
    %p94 = scmp.eq.s32.totalorder %s18, 3
    %p95 = por %p93, %p94
    %p97 = scmp.ne.s32.totalorder %s80, %s96
    %p98 = scmp.eq.s32.totalorder %s18, 0
    %p99 = por %p97, %p98
    %s100 = smul.u32 %s20, 8
    %s101 = sadd.s32 %s100, 8
    %p102 = scmp.gt.s32.totalorder %s101, 0
    %s103 = scalar_select %p102, %s101, 0
    %p104 = scmp.lt.s32.totalorder %s103, 15
    %s105 = scalar_select %p104, %s103, 15
    %s106 = smul.u32 %s27, 8
    %s107 = sadd.s32 %s106, 8
    %p108 = scmp.gt.s32.totalorder %s107, 0
    %s109 = scalar_select %p108, %s107, 0
    %p110 = scmp.lt.s32.totalorder %s109, 15
    %s111 = scalar_select %p110, %s109, 15
    %s112 = ssub.s32 %s19, %s31
    %s113 = ssub.s32 %s105, %s111
    %s114 = sor.u32 %s112, %s113
    %p115 = scmp.eq.s32.totalorder %s114, 0
    %s117 = sadd.s32 %s116, 1
    %s118 = scalar_select %p115, %s116, %s117
    %p121 = pneg %p115
    %p122 = scmp.eq.s32.totalorder %s12, 3
    %p123 = por %p121, %p122
    %p124 = scmp.ne.s32.totalorder %s116, %s119
    %p125 = scmp.eq.s32.totalorder %s12, 0
    %p126 = por %p124, %p125
    %p127 = scmp.ne.s32.totalorder %s116, %s119
    %p128 = scmp.eq.s32.totalorder %s17, 3
    %p129 = por %p127, %p128
    %p130 = scmp.ne.s32.totalorder %s119, %s120
    %p131 = scmp.eq.s32.totalorder %s17, 0
    %p132 = por %p130, %p131
    %p133 = scmp.ne.s32.totalorder %s119, %s120
    %p134 = scmp.eq.s32.totalorder %s18, 3
    %p135 = por %p133, %p134
    %p137 = scmp.ne.s32.totalorder %s120, %s136
    %p138 = scmp.eq.s32.totalorder %s18, 0
    %p139 = por %p137, %p138
    %s141 = sadd.s32 %s140, 1
    %p144 = scmp.eq.s32.totalorder %s12, 3
    %p145 = scmp.ne.s32.totalorder %s140, %s142
    %p146 = scmp.eq.s32.totalorder %s12, 0
    %p147 = por %p145, %p146
    %p148 = scmp.ne.s32.totalorder %s140, %s142
    %p149 = scmp.eq.s32.totalorder %s17, 3
    %p150 = por %p148, %p149
    %p151 = scmp.ne.s32.totalorder %s142, %s143
    %p152 = scmp.eq.s32.totalorder %s17, 0
    %p153 = por %p151, %p152
    %p154 = scmp.ne.s32.totalorder %s142, %s143
    %p155 = scmp.eq.s32.totalorder %s18, 3
    %p156 = por %p154, %p155
    %p158 = scmp.ne.s32.totalorder %s143, %s157
    %p159 = scmp.eq.s32.totalorder %s18, 0
    %p160 = por %p158, %p159
    %s162 = sadd.s32 %s161, 1
    %p165 = scmp.eq.s32.totalorder %s12, 3
    %p166 = scmp.ne.s32.totalorder %s161, %s163
    %p167 = scmp.eq.s32.totalorder %s12, 0
    %p168 = por %p166, %p167
    %p169 = scmp.ne.s32.totalorder %s161, %s163
    %p170 = scmp.eq.s32.totalorder %s17, 3
    %p171 = por %p169, %p170
    %p172 = scmp.ne.s32.totalorder %s163, %s164
    %p173 = scmp.eq.s32.totalorder %s17, 0
    %p174 = por %p172, %p173
    %p175 = scmp.ne.s32.totalorder %s163, %s164
    %p176 = scmp.eq.s32.totalorder %s18, 3
    %p177 = por %p175, %p176
    %p179 = scmp.ne.s32.totalorder %s164, %s178
    %p180 = scmp.eq.s32.totalorder %s18, 0
    %p181 = por %p179, %p180
    %s183 = sadd.s32 %s182, 1
    %p186 = scmp.eq.s32.totalorder %s12, 3
    %p187 = scmp.ne.s32.totalorder %s182, %s184
    %p188 = scmp.eq.s32.totalorder %s12, 0
    %p189 = por %p187, %p188
    %p190 = scmp.ne.s32.totalorder %s182, %s184
    %p191 = scmp.eq.s32.totalorder %s17, 3
    %p192 = por %p190, %p191
    %p193 = scmp.ne.s32.totalorder %s184, %s185
    %p194 = scmp.eq.s32.totalorder %s17, 0
    %p195 = por %p193, %p194
    %p196 = scmp.ne.s32.totalorder %s184, %s185
    %p197 = scmp.eq.s32.totalorder %s18, 3
    %p198 = por %p196, %p197
    %p200 = scmp.ne.s32.totalorder %s185, %s199
    %p201 = scmp.eq.s32.totalorder %s18, 0
    %p202 = por %p200, %p201
    %s203 = ssub.s32 %s19, %s31
    %s204 = ssub.s32 %s20, %s27
    %s205 = sor.u32 %s203, %s204
    %p206 = scmp.eq.s32.totalorder %s205, 0
    %s208 = sadd.s32 %s207, 1
    %s209 = scalar_select %p206, %s207, %s208
    %p212 = pneg %p206
    %p213 = scmp.eq.s32.totalorder %s12, 3
    %p214 = por %p212, %p213
    %p215 = scmp.ne.s32.totalorder %s207, %s210
    %p216 = scmp.eq.s32.totalorder %s12, 0
    %p217 = por %p215, %p216
    %p218 = scmp.ne.s32.totalorder %s207, %s210
    %p219 = scmp.eq.s32.totalorder %s17, 3
    %p220 = por %p218, %p219
    %p221 = scmp.ne.s32.totalorder %s210, %s211
    %p222 = scmp.eq.s32.totalorder %s17, 0
    %p223 = por %p221, %p222
    %p224 = scmp.ne.s32.totalorder %s210, %s211
    %p225 = scmp.eq.s32.totalorder %s18, 3
    %p226 = por %p224, %p225
    %p228 = scmp.ne.s32.totalorder %s211, %s227
    %p229 = scmp.eq.s32.totalorder %s18, 0
    %p230 = por %p228, %p229
    %p231 = scmp.le.s32.totalorder 1, %s12
    %p232 = scmp.lt.s32.totalorder %s12, 5
    %p233 = pnand %p231, %p232
    %p234 = pneg %p233
    // Predicated region
    $region9: #{tpu_custom_call.1} parent=5 // pred_check
      _
    $region10: #{tpu_custom_call.1} parent=5 // pred_check_branch
      %236 = sbr.rel (%p233) target = $region12
    $region11: #{tpu_custom_call.1} parent=5 // pred_region
      %s237 = ssub.s32 %s12, 1
      // Predicated region
      $region13: #{tpu_custom_call.1} parent=11 // pred_check
        %p238 = pneg %p153
      $region14: #{tpu_custom_call.1} parent=11 // pred_check_branch
        %240 = sbr.rel (%p238) target = $region16
      $region15: #{tpu_custom_call.1} parent=11 // pred_region
        _
      $region16: #{tpu_custom_call.1} parent=11 // pred_fallthru
        _
      // Predicated region
      $region17: #{tpu_custom_call.1} parent=11 // pred_check
        %p241 = pneg %p174
      $region18: #{tpu_custom_call.1} parent=11 // pred_check_branch
        %243 = sbr.rel (%p241) target = $region20
      $region19: #{tpu_custom_call.1} parent=11 // pred_region
        _
      $region20: #{tpu_custom_call.1} parent=11 // pred_fallthru
        _
      // Predicated region
      $region21: #{tpu_custom_call.1} parent=11 // pred_check
        %p244 = pneg %p195
      $region22: #{tpu_custom_call.1} parent=11 // pred_check_branch
        %246 = sbr.rel (%p244) target = $region24
      $region23: #{tpu_custom_call.1} parent=11 // pred_region
        _
      $region24: #{tpu_custom_call.1} parent=11 // pred_fallthru
        _
    $region12: #{tpu_custom_call.1} parent=5 // pred_fallthru
      _
    %p247 = scmp.lt.s32.totalorder %s12, 4
    // Predicated region
    $region25: #{tpu_custom_call.1} parent=5 // pred_check
      %p248 = pneg %p247
    $region26: #{tpu_custom_call.1} parent=5 // pred_check_branch
      %250 = sbr.rel (%p248) target = $region28
    $region27: #{tpu_custom_call.1} parent=5 // pred_region
      // Predicated region
      $region29: #{tpu_custom_call.1} parent=27 // pred_check
        %p251 = pneg %p46
      $region30: #{tpu_custom_call.1} parent=27 // pred_check_branch
        %253 = sbr.rel (%p251) target = $region32
      $region31: #{tpu_custom_call.1} parent=27 // pred_region
        %s254 = smul.u32 8, %s20
        %p255 = scmp.lt.s32.totalorder %s19, 1
        %s256 = scalar_select %p255, %s19, 1
        %p257 = scmp.lt.s32.totalorder %s254, 15
        %s258 = scalar_select %p257, %s254, 15
        %s259 = smul.addr %s258, 2
        %s260 = smul.addr %s256, 32
        %s261 = sadd.s32 %s259, %s260
        %s262 = smul.addr %s261, 8
        %s263 = scalar_lea.vmem %s0, %s262
        %s264 = smul.u32 8, %s20
      $region32: #{tpu_custom_call.1} parent=27 // pred_fallthru
        _
      // Predicated region
      $region33: #{tpu_custom_call.1} parent=27 // pred_check
        %p265 = pneg %p86
      $region34: #{tpu_custom_call.1} parent=27 // pred_check_branch
        %267 = sbr.rel (%p265) target = $region36
      $region35: #{tpu_custom_call.1} parent=27 // pred_region
        %s268 = smul.u32 %s20, 8
        %s269 = sadd.s32 %s268, 4294967295
        %p270 = scmp.gt.s32.totalorder %s269, 0
        %s271 = scalar_select %p270, %s269, 0
        %p272 = scmp.lt.s32.totalorder %s271, 15
        %s273 = scalar_select %p272, %s271, 15
        %p274 = scmp.lt.s32.totalorder %s19, 1
        %s275 = scalar_select %p274, %s19, 1
        %p276 = scmp.lt.s32.totalorder %s273, 15
        %s277 = scalar_select %p276, %s273, 15
        %s278 = smul.addr %s277, 2
        %s279 = smul.addr %s275, 32
        %s280 = sadd.s32 %s278, %s279
        %s281 = smul.addr %s280, 8
        %s282 = scalar_lea.vmem %s1, %s281
        %s283 = smul.u32 %s20, 8
        %s284 = sadd.s32 %s283, 4294967295
        %p285 = scmp.gt.s32.totalorder %s284, 0
        %s286 = scalar_select %p285, %s284, 0
        %p287 = scmp.lt.s32.totalorder %s286, 15
        %s288 = scalar_select %p287, %s286, 15
      $region36: #{tpu_custom_call.1} parent=27 // pred_fallthru
        _
      // Predicated region
      $region37: #{tpu_custom_call.1} parent=27 // pred_check
        %p289 = pneg %p126
      $region38: #{tpu_custom_call.1} parent=27 // pred_check_branch
        %291 = sbr.rel (%p289) target = $region40
      $region39: #{tpu_custom_call.1} parent=27 // pred_region
        %s292 = smul.u32 %s20, 8
        %s293 = sadd.s32 %s292, 8
        %p294 = scmp.gt.s32.totalorder %s293, 0
        %s295 = scalar_select %p294, %s293, 0
        %p296 = scmp.lt.s32.totalorder %s295, 15
        %s297 = scalar_select %p296, %s295, 15
        %p298 = scmp.lt.s32.totalorder %s19, 1
        %s299 = scalar_select %p298, %s19, 1
        %p300 = scmp.lt.s32.totalorder %s297, 15
        %s301 = scalar_select %p300, %s297, 15
        %s302 = smul.addr %s301, 2
        %s303 = smul.addr %s299, 32
        %s304 = sadd.s32 %s302, %s303
        %s305 = smul.addr %s304, 8
        %s306 = scalar_lea.vmem %s2, %s305
        %s307 = smul.u32 %s20, 8
        %s308 = sadd.s32 %s307, 8
        %p309 = scmp.gt.s32.totalorder %s308, 0
        %s310 = scalar_select %p309, %s308, 0
        %p311 = scmp.lt.s32.totalorder %s310, 15
        %s312 = scalar_select %p311, %s310, 15
      $region40: #{tpu_custom_call.1} parent=27 // pred_fallthru
        _
    $region28: #{tpu_custom_call.1} parent=5 // pred_fallthru
      _
    %p313 = scmp.le.s32.totalorder 1, %s12
    %p314 = scmp.lt.s32.totalorder %s12, 5
    %p315 = pnand %p313, %p314
    %p316 = pneg %p315
    // Predicated region
    $region41: #{tpu_custom_call.1} parent=5 // pred_check
      _
    $region42: #{tpu_custom_call.1} parent=5 // pred_check_branch
      %318 = sbr.rel (%p315) target = $region44
    $region43: #{tpu_custom_call.1} parent=5 // pred_region
      %s319 = ssub.s32 %s12, 1
      %s320 = smul.u32 8, %s22
      %p321 = scmp.lt.s32.totalorder %s21, 1
      %s322 = scalar_select %p321, %s21, 1
      %p323 = scmp.lt.s32.totalorder %s320, 15
      %s324 = scalar_select %p323, %s320, 15
      %s325 = smul.addr %s324, 2
      %s326 = smul.addr %s322, 32
      %s327 = sadd.s32 %s325, %s326
      %s328 = smul.addr %s327, 8
      %s329 = scalar_lea.vmem %s0, %s328
      %p330 = pneg %p52
      %p331 = pneg %p49
      %s332 = smul.u32 %s22, 8
      %s333 = sadd.s32 %s332, 4294967295
      %p334 = scmp.gt.s32.totalorder %s333, 0
      %s335 = scalar_select %p334, %s333, 0
      %p336 = scmp.lt.s32.totalorder %s335, 15
      %s337 = scalar_select %p336, %s335, 15
      %p338 = scmp.lt.s32.totalorder %s21, 1
      %s339 = scalar_select %p338, %s21, 1
      %p340 = scmp.lt.s32.totalorder %s337, 15
      %s341 = scalar_select %p340, %s337, 15
      %s342 = smul.addr %s341, 2
      %s343 = smul.addr %s339, 32
      %s344 = sadd.s32 %s342, %s343
      %s345 = smul.addr %s344, 8
      %s346 = scalar_lea.vmem %s1, %s345
      %p347 = pneg %p92
      %p348 = pneg %p89
      %s349 = smul.u32 %s22, 8
      %s350 = sadd.s32 %s349, 8
      %p351 = scmp.gt.s32.totalorder %s350, 0
      %s352 = scalar_select %p351, %s350, 0
      %p353 = scmp.lt.s32.totalorder %s352, 15
      %s354 = scalar_select %p353, %s352, 15
      %p355 = scmp.lt.s32.totalorder %s21, 1
      %s356 = scalar_select %p355, %s21, 1
      %p357 = scmp.lt.s32.totalorder %s354, 15
      %s358 = scalar_select %p357, %s354, 15
      %s359 = smul.addr %s358, 2
      %s360 = smul.addr %s356, 32
      %s361 = sadd.s32 %s359, %s360
      %s362 = smul.addr %s361, 8
      %s363 = scalar_lea.vmem %s2, %s362
      %p364 = pneg %p132
      %p365 = pneg %p129
      %p366 = pneg %p153
      %p367 = pneg %p150
      %p368 = pneg %p174
      %p369 = pneg %p171
      %p370 = pneg %p195
      %p371 = pneg %p192
      %p372 = pneg %p223
      %p373 = pneg %p220
      %s374 = smul.u32 8, %s22
      %p375 = scmp.lt.s32.totalorder %s21, 1
      %s376 = scalar_select %p375, %s21, 1
      %p377 = scmp.lt.s32.totalorder %s374, 15
      %s378 = scalar_select %p377, %s374, 15
      %s379 = smul.addr %s378, 2
      %s380 = smul.addr %s376, 32
      %s381 = sadd.s32 %s379, %s380
      %s382 = smul.addr %s381, 8
      %s383 = scalar_lea.vmem %s6, %s382
      %s384 = smul.u32 8, %s22
      %p385 = scmp.lt.s32.totalorder %s21, 1
      %s386 = scalar_select %p385, %s21, 1
      %p387 = scmp.lt.s32.totalorder %s384, 15
      %s388 = scalar_select %p387, %s384, 15
      %s389 = smul.addr %s388, 2
      %s390 = smul.addr %s386, 32
      %s391 = sadd.s32 %s389, %s390
      %s392 = smul.addr %s391, 8
      %s393 = scalar_lea.vmem %s0, %s392
      %s394 = smul.u32 8, %s22
      %s395 = smul.u32 %s22, 8
      %s396 = sadd.s32 %s395, 4294967295
      %p397 = scmp.gt.s32.totalorder %s396, 0
      %s398 = scalar_select %p397, %s396, 0
      %p399 = scmp.lt.s32.totalorder %s398, 15
      %s400 = scalar_select %p399, %s398, 15
      %p401 = scmp.lt.s32.totalorder %s21, 1
      %s402 = scalar_select %p401, %s21, 1
      %p403 = scmp.lt.s32.totalorder %s400, 15
      %s404 = scalar_select %p403, %s400, 15
      %s405 = smul.addr %s404, 2
      %s406 = smul.addr %s402, 32
      %s407 = sadd.s32 %s405, %s406
      %s408 = smul.addr %s407, 8
      %s409 = scalar_lea.vmem %s1, %s408
      %s410 = smul.u32 %s22, 8
      %s411 = sadd.s32 %s410, 4294967295
      %p412 = scmp.gt.s32.totalorder %s411, 0
      %s413 = scalar_select %p412, %s411, 0
      %p414 = scmp.lt.s32.totalorder %s413, 15
      %s415 = scalar_select %p414, %s413, 15
      %s416 = smul.u32 %s22, 8
      %s417 = sadd.s32 %s416, 8
      %p418 = scmp.gt.s32.totalorder %s417, 0
      %s419 = scalar_select %p418, %s417, 0
      %p420 = scmp.lt.s32.totalorder %s419, 15
      %s421 = scalar_select %p420, %s419, 15
      %p422 = scmp.lt.s32.totalorder %s21, 1
      %s423 = scalar_select %p422, %s21, 1
      %p424 = scmp.lt.s32.totalorder %s421, 15
      %s425 = scalar_select %p424, %s421, 15
      %s426 = smul.addr %s425, 2
      %s427 = smul.addr %s423, 32
      %s428 = sadd.s32 %s426, %s427
      %s429 = smul.addr %s428, 8
      %s430 = scalar_lea.vmem %s2, %s429
      %s431 = smul.u32 %s22, 8
      %s432 = sadd.s32 %s431, 8
      %p433 = scmp.gt.s32.totalorder %s432, 0
      %s434 = scalar_select %p433, %s432, 0
      %p435 = scmp.lt.s32.totalorder %s434, 15
      %s436 = scalar_select %p435, %s434, 15
      %s437 = smul.u32 8, %s22
      %p438 = scmp.lt.s32.totalorder %s21, 1
      %s439 = scalar_select %p438, %s21, 1
      %p440 = scmp.lt.s32.totalorder %s437, 15
      %s441 = scalar_select %p440, %s437, 15
      %s442 = smul.addr %s441, 2
      %s443 = smul.addr %s439, 32
      %s444 = sadd.s32 %s442, %s443
      %s445 = smul.addr %s444, 8
      %s446 = scalar_lea.vmem %s6, %s445
      %s447 = smul.u32 8, %s22
      %s448 = smul.u32 %s22, 8
      %v449 = vld [vmem:[%s393] sm:$0xff]
      %v450 = vld [vmem:[%s393 + $0x8] sm:$0xff]
      %v451 = vld [vmem:[%s393 + $0x10] sm:$0xff]
      %v452 = vld [vmem:[%s393 + $0x18] sm:$0xff]
      %v453 = vld [vmem:[%s393 + $0x20] sm:$0xff]
      %v454 = vld [vmem:[%s393 + $0x28] sm:$0xff]
      %v455 = vld [vmem:[%s393 + $0x30] sm:$0xff]
      %v456 = vld [vmem:[%s393 + $0x38] sm:$0xff]
      %v457 = vld [vmem:[%s393 + $0x40] sm:$0xff]
      %v458 = vld [vmem:[%s393 + $0x48] sm:$0xff]
      %v459 = vld [vmem:[%s393 + $0x50] sm:$0xff]
      %v460 = vld [vmem:[%s393 + $0x58] sm:$0xff]
      %v461 = vld [vmem:[%s393 + $0x60] sm:$0xff]
      %v462 = vld [vmem:[%s393 + $0x68] sm:$0xff]
      %v463 = vld [vmem:[%s393 + $0x70] sm:$0xff]
      %v464 = vld [vmem:[%s393 + $0x78] sm:$0xff]
      %v465 = vld [vmem:[%s409] sm:$0xff]
      %v466 = vld [vmem:[%s409 + $0x8] sm:$0xff]
      %v467 = vld [vmem:[%s430] sm:$0xff]
      %v468 = vld [vmem:[%s430 + $0x8] sm:$0xff]
      %v469 = vld [vmem:[%s5] sm:$0x1]
      %v471 = vperm.slane %v469, 0
      %v473 = vsub.f32 %v449, %v471
      %v474 = vsub.f32 %v450, %v471
      %v475 = vsub.f32 %v451, %v471
      %v476 = vsub.f32 %v452, %v471
      %v477 = vsub.f32 %v453, %v471
      %v478 = vsub.f32 %v454, %v471
      %v479 = vsub.f32 %v455, %v471
      %v480 = vsub.f32 %v456, %v471
      %v481 = vsub.f32 %v457, %v471
      %v482 = vsub.f32 %v458, %v471
      %v483 = vsub.f32 %v459, %v471
      %v484 = vsub.f32 %v460, %v471
      %v485 = vsub.f32 %v461, %v471
      %v486 = vsub.f32 %v462, %v471
      %v487 = vsub.f32 %v463, %v471
      %v488 = vsub.f32 %v464, %v471
      %v489 = vsub.f32 %v465, %v471
      %v490 = vsub.f32 %v466, %v471
      %v491 = vsub.f32 %v467, %v471
      %v492 = vsub.f32 %v468, %v471
      %s493 = ssub.s32 %s448, 1
      %p494 = scmp.ge.s32.totalorder %s493, 0
      %s495 = scalar_select %p494, 1, 0
      %v496 = vstv %s495
      %vm497 = vcmp.eq.s32.totalorder %v496, 1
      %v498 = vsel %vm497, %v489, 0.0
      %v499 = vsel %vm497, %v490, 0.0
      %s500 = sadd.s32 %s448, 8
      %p501 = scmp.le.s32.totalorder %s500, 15
      %s502 = scalar_select %p501, 1, 0
      %v503 = vstv %s502
      %vm504 = vcmp.eq.s32.totalorder %v503, 1
      %v505 = vsel %vm504, %v491, 0.0
      %v506 = vsel %vm504, %v492, 0.0
      %v507 = vld [vmem:[%s3] sm:$0xff]
      %v508 = vld [vmem:[%s3 + $0x8] sm:$0x1]
      %v509 = vld [vmem:[%s3 + $0x10] sm:$0xff]
      %v510 = vld [vmem:[%s3 + $0x18] sm:$0x1]
      %v511 = vld [vmem:[%s3 + $0x20] sm:$0xff]
      %v512 = vld [vmem:[%s3 + $0x28] sm:$0x1]
      %v513 = vld [vmem:[%s4] sm:$0x1]
      %vm534 = vcmask 1040384
      %v535 = vrot.slane %v498, 7
      %v536 = vrot.slane %v499, 7
      %v537 = vsel %vm534, %v535, %v536
      %v538 = vrot.slane %v473, 7
      %v539 = vrot.slane %v474, 7
      %v540 = vsel %vm534, %v538, %v539
      %v541 = vrot.slane %v475, 7
      %v542 = vrot.slane %v476, 7
      %v543 = vsel %vm534, %v541, %v542
      %v544 = vrot.slane %v477, 7
      %v545 = vrot.slane %v478, 7
      %v546 = vsel %vm534, %v544, %v545
      %v547 = vrot.slane %v479, 7
      %v548 = vrot.slane %v480, 7
      %v549 = vsel %vm534, %v547, %v548
      %v550 = vrot.slane %v481, 7
      %v551 = vrot.slane %v482, 7
      %v552 = vsel %vm534, %v550, %v551
      %v553 = vrot.slane %v483, 7
      %v554 = vrot.slane %v484, 7
      %v555 = vsel %vm534, %v553, %v554
      %v556 = vrot.slane %v485, 7
      %v557 = vrot.slane %v486, 7
      %v558 = vsel %vm534, %v556, %v557
      %v559 = vrot.slane %v487, 7
      %v560 = vrot.slane %v488, 7
      %v561 = vsel %vm534, %v559, %v560
      %v562 = vrot.slane %v505, 7
      %v563 = vrot.slane %v506, 7
      %v564 = vsel %vm534, %v562, %v563
      %v583 = vsel %vm534, 0.0, %v535
      %v584 = vsel %vm534, 0.0, %v538
      %v585 = vsel %vm534, 0.0, %v541
      %v586 = vsel %vm534, 0.0, %v544
      %v587 = vsel %vm534, 0.0, %v547
      %v588 = vsel %vm534, 0.0, %v550
      %v589 = vsel %vm534, 0.0, %v553
      %v590 = vsel %vm534, 0.0, %v556
      %v591 = vsel %vm534, 0.0, %v559
      %v592 = vsel %vm534, 0.0, %v562
      %601 = vrot.lane.b32.xlu0 %v584, 3
      %v602 = vpop.permute.xlu0 %601
      %603 = vrot.lane.b32.xlu0 %v540, 3
      %v604 = vpop.permute.xlu0 %603
      %605 = vrot.lane.b32.xlu0 %v585, 3
      %v606 = vpop.permute.xlu0 %605
      %607 = vrot.lane.b32.xlu0 %v543, 3
      %v608 = vpop.permute.xlu0 %607
      %609 = vrot.lane.b32.xlu0 %v586, 3
      %v610 = vpop.permute.xlu0 %609
      %611 = vrot.lane.b32.xlu0 %v546, 3
      %v612 = vpop.permute.xlu0 %611
      %613 = vrot.lane.b32.xlu0 %v587, 3
      %v614 = vpop.permute.xlu0 %613
      %615 = vrot.lane.b32.xlu0 %v549, 3
      %v616 = vpop.permute.xlu0 %615
      %617 = vrot.lane.b32.xlu0 %v588, 3
      %v618 = vpop.permute.xlu0 %617
      %619 = vrot.lane.b32.xlu0 %v552, 3
      %v620 = vpop.permute.xlu0 %619
      %621 = vrot.lane.b32.xlu0 %v589, 3
      %v622 = vpop.permute.xlu0 %621
      %623 = vrot.lane.b32.xlu0 %v555, 3
      %v624 = vpop.permute.xlu0 %623
      %625 = vrot.lane.b32.xlu0 %v590, 3
      %v626 = vpop.permute.xlu0 %625
      %627 = vrot.lane.b32.xlu0 %v558, 3
      %v628 = vpop.permute.xlu0 %627
      %629 = vrot.lane.b32.xlu0 %v591, 3
      %v630 = vpop.permute.xlu0 %629
      %631 = vrot.lane.b32.xlu0 %v561, 3
      %v632 = vpop.permute.xlu0 %631
      %650 = vrot.lane.b32.xlu0 %v585, 6
      %v651 = vpop.permute.xlu0 %650
      %652 = vrot.lane.b32.xlu0 %v543, 6
      %v653 = vpop.permute.xlu0 %652
      %654 = vrot.lane.b32.xlu0 %v586, 6
      %v655 = vpop.permute.xlu0 %654
      %656 = vrot.lane.b32.xlu0 %v546, 6
      %v657 = vpop.permute.xlu0 %656
      %658 = vrot.lane.b32.xlu0 %v587, 6
      %v659 = vpop.permute.xlu0 %658
      %660 = vrot.lane.b32.xlu0 %v549, 6
      %v661 = vpop.permute.xlu0 %660
      %662 = vrot.lane.b32.xlu0 %v588, 6
      %v663 = vpop.permute.xlu0 %662
      %664 = vrot.lane.b32.xlu0 %v552, 6
      %v665 = vpop.permute.xlu0 %664
      %666 = vrot.lane.b32.xlu0 %v589, 6
      %v667 = vpop.permute.xlu0 %666
      %668 = vrot.lane.b32.xlu0 %v555, 6
      %v669 = vpop.permute.xlu0 %668
      %670 = vrot.lane.b32.xlu0 %v590, 6
      %v671 = vpop.permute.xlu0 %670
      %672 = vrot.lane.b32.xlu0 %v558, 6
      %v673 = vpop.permute.xlu0 %672
      %674 = vrot.lane.b32.xlu0 %v591, 6
      %v675 = vpop.permute.xlu0 %674
      %676 = vrot.lane.b32.xlu0 %v561, 6
      %v677 = vpop.permute.xlu0 %676
      %678 = vrot.lane.b32.xlu0 %v592, 6
      %v679 = vpop.permute.xlu0 %678
      %680 = vrot.lane.b32.xlu0 %v564, 6
      %v681 = vpop.permute.xlu0 %680
      %vm698 = vcmask 23552
      %v699 = vsel %vm698, %v583, %v602
      %v700 = vsel %vm698, %v537, %v604
      %v701 = vsel %vm698, %v584, %v606
      %v702 = vsel %vm698, %v540, %v608
      %v703 = vsel %vm698, %v585, %v610
      %v704 = vsel %vm698, %v543, %v612
      %v705 = vsel %vm698, %v586, %v614
      %v706 = vsel %vm698, %v546, %v616
      %v707 = vsel %vm698, %v587, %v618
      %v708 = vsel %vm698, %v549, %v620
      %v709 = vsel %vm698, %v588, %v622
      %v710 = vsel %vm698, %v552, %v624
      %v711 = vsel %vm698, %v589, %v626
      %v712 = vsel %vm698, %v555, %v628
      %v713 = vsel %vm698, %v590, %v630
      %v714 = vsel %vm698, %v558, %v632
      %vm715 = vcmask 48128
      %v716 = vsel %vm715, %v699, %v651
      %v717 = vsel %vm715, %v700, %v653
      %v718 = vsel %vm715, %v701, %v655
      %v719 = vsel %vm715, %v702, %v657
      %v720 = vsel %vm715, %v703, %v659
      %v721 = vsel %vm715, %v704, %v661
      %v722 = vsel %vm715, %v705, %v663
      %v723 = vsel %vm715, %v706, %v665
      %v724 = vsel %vm715, %v707, %v667
      %v725 = vsel %vm715, %v708, %v669
      %v726 = vsel %vm715, %v709, %v671
      %v727 = vsel %vm715, %v710, %v673
      %v728 = vsel %vm715, %v711, %v675
      %v729 = vsel %vm715, %v712, %v677
      %v730 = vsel %vm715, %v713, %v679
      %v731 = vsel %vm715, %v714, %v681
      %732 = vrot.lane.b32.xlu0 %v473, 3
      %v733 = vpop.permute.xlu0 %732
      %734 = vrot.lane.b32.xlu0 %v474, 3
      %v735 = vpop.permute.xlu0 %734
      %736 = vrot.lane.b32.xlu0 %v475, 3
      %v737 = vpop.permute.xlu0 %736
      %738 = vrot.lane.b32.xlu0 %v476, 3
      %v739 = vpop.permute.xlu0 %738
      %740 = vrot.lane.b32.xlu0 %v477, 3
      %v741 = vpop.permute.xlu0 %740
      %742 = vrot.lane.b32.xlu0 %v478, 3
      %v743 = vpop.permute.xlu0 %742
      %744 = vrot.lane.b32.xlu0 %v479, 3
      %v745 = vpop.permute.xlu0 %744
      %746 = vrot.lane.b32.xlu0 %v480, 3
      %v747 = vpop.permute.xlu0 %746
      %748 = vrot.lane.b32.xlu0 %v481, 3
      %v749 = vpop.permute.xlu0 %748
      %750 = vrot.lane.b32.xlu0 %v482, 3
      %v751 = vpop.permute.xlu0 %750
      %752 = vrot.lane.b32.xlu0 %v483, 3
      %v753 = vpop.permute.xlu0 %752
      %754 = vrot.lane.b32.xlu0 %v484, 3
      %v755 = vpop.permute.xlu0 %754
      %756 = vrot.lane.b32.xlu0 %v485, 3
      %v757 = vpop.permute.xlu0 %756
      %758 = vrot.lane.b32.xlu0 %v486, 3
      %v759 = vpop.permute.xlu0 %758
      %760 = vrot.lane.b32.xlu0 %v487, 3
      %v761 = vpop.permute.xlu0 %760
      %762 = vrot.lane.b32.xlu0 %v488, 3
      %v763 = vpop.permute.xlu0 %762
      %780 = vrot.lane.b32.xlu0 %v475, 6
      %v781 = vpop.permute.xlu0 %780
      %782 = vrot.lane.b32.xlu0 %v476, 6
      %v783 = vpop.permute.xlu0 %782
      %784 = vrot.lane.b32.xlu0 %v477, 6
      %v785 = vpop.permute.xlu0 %784
      %786 = vrot.lane.b32.xlu0 %v478, 6
      %v787 = vpop.permute.xlu0 %786
      %788 = vrot.lane.b32.xlu0 %v479, 6
      %v789 = vpop.permute.xlu0 %788
      %790 = vrot.lane.b32.xlu0 %v480, 6
      %v791 = vpop.permute.xlu0 %790
      %792 = vrot.lane.b32.xlu0 %v481, 6
      %v793 = vpop.permute.xlu0 %792
      %794 = vrot.lane.b32.xlu0 %v482, 6
      %v795 = vpop.permute.xlu0 %794
      %796 = vrot.lane.b32.xlu0 %v483, 6
      %v797 = vpop.permute.xlu0 %796
      %798 = vrot.lane.b32.xlu0 %v484, 6
      %v799 = vpop.permute.xlu0 %798
      %800 = vrot.lane.b32.xlu0 %v485, 6
      %v801 = vpop.permute.xlu0 %800
      %802 = vrot.lane.b32.xlu0 %v486, 6
      %v803 = vpop.permute.xlu0 %802
      %804 = vrot.lane.b32.xlu0 %v487, 6
      %v805 = vpop.permute.xlu0 %804
      %806 = vrot.lane.b32.xlu0 %v488, 6
      %v807 = vpop.permute.xlu0 %806
      %808 = vrot.lane.b32.xlu0 %v505, 6
      %v809 = vpop.permute.xlu0 %808
      %810 = vrot.lane.b32.xlu0 %v506, 6
      %v811 = vpop.permute.xlu0 %810
      %v828 = vsel %vm698, %v498, %v733
      %v829 = vsel %vm698, %v499, %v735
      %v830 = vsel %vm698, %v473, %v737
      %v831 = vsel %vm698, %v474, %v739
      %v832 = vsel %vm698, %v475, %v741
      %v833 = vsel %vm698, %v476, %v743
      %v834 = vsel %vm698, %v477, %v745
      %v835 = vsel %vm698, %v478, %v747
      %v836 = vsel %vm698, %v479, %v749
      %v837 = vsel %vm698, %v480, %v751
      %v838 = vsel %vm698, %v481, %v753
      %v839 = vsel %vm698, %v482, %v755
      %v840 = vsel %vm698, %v483, %v757
      %v841 = vsel %vm698, %v484, %v759
      %v842 = vsel %vm698, %v485, %v761
      %v843 = vsel %vm698, %v486, %v763
      %v844 = vsel %vm715, %v828, %v781
      %v845 = vsel %vm715, %v829, %v783
      %v846 = vsel %vm715, %v830, %v785
      %v847 = vsel %vm715, %v831, %v787
      %v848 = vsel %vm715, %v832, %v789
      %v849 = vsel %vm715, %v833, %v791
      %v850 = vsel %vm715, %v834, %v793
      %v851 = vsel %vm715, %v835, %v795
      %v852 = vsel %vm715, %v836, %v797
      %v853 = vsel %vm715, %v837, %v799
      %v854 = vsel %vm715, %v838, %v801
      %v855 = vsel %vm715, %v839, %v803
      %v856 = vsel %vm715, %v840, %v805
      %v857 = vsel %vm715, %v841, %v807
      %v858 = vsel %vm715, %v842, %v809
      %v859 = vsel %vm715, %v843, %v811
      %vm860 = vcmask 72704
      %v862 = vsel %vm860, %v844, 0
      %v865 = vsel %vm860, %v845, 0
      %v868 = vsel %vm860, %v846, 0
      %v871 = vsel %vm860, %v847, 0
      %v874 = vsel %vm860, %v848, 0
      %v877 = vsel %vm860, %v849, 0
      %v880 = vsel %vm860, %v850, 0
      %v883 = vsel %vm860, %v851, 0
      %v886 = vsel %vm860, %v852, 0
      %v889 = vsel %vm860, %v853, 0
      %v892 = vsel %vm860, %v854, 0
      %v895 = vsel %vm860, %v855, 0
      %v898 = vsel %vm860, %v856, 0
      %v901 = vsel %vm860, %v857, 0
      %v904 = vsel %vm860, %v858, 0
      %v907 = vsel %vm860, %v859, 0
      %v910 = vsel %vm534, %v510, 0
      %912 = vmatpush.msra.mxu0 0.0
      %913 = vmatpush.msra.mxu0 0.0
      %914 = vmatpush.msra.mxu0 0.0
      %915 = vmatpush.msra.mxu0 0.0
      %916 = vmatpush.msra.mxu0 0.0
      %917 = vmatpush.msra.mxu0 0.0
      %918 = vmatpush.msra.mxu0 0.0
      %919 = vmatpush.msra.mxu0 0.0
      %920 = vmatpush.msra.mxu0 0.0
      %921 = vmatpush.msra.mxu0 0.0
      %922 = vmatpush.msra.mxu0 0.0
      %923 = vmatpush.msra.mxu0 0.0
      %924 = vmatpush.msra.mxu0 0.0
      %925 = vmatpush.msra.mxu0 0.0
      %926 = vmatpush.msra.mxu0 %v910
      %927 = vmatpush.msra.mxu0 %v509
      %928 = vmatmul.f32.gmra.mxu0 %v862
      %v929 = vpop.f32.mrf.mxu0
      %v930 = vadd.f32 0.0, %v929
      %931 = vmatmul.f32.gmra.mxu0 %v865
      %v932 = vpop.f32.mrf.mxu0
      %v933 = vadd.f32 0.0, %v932
      %934 = vmatmul.f32.gmra.mxu0 %v868
      %v935 = vpop.f32.mrf.mxu0
      %v936 = vadd.f32 0.0, %v935
      %937 = vmatmul.f32.gmra.mxu0 %v871
      %v938 = vpop.f32.mrf.mxu0
      %v939 = vadd.f32 0.0, %v938
      %940 = vmatmul.f32.gmra.mxu0 %v874
      %v941 = vpop.f32.mrf.mxu0
      %v942 = vadd.f32 0.0, %v941
      %943 = vmatmul.f32.gmra.mxu0 %v877
      %v944 = vpop.f32.mrf.mxu0
      %v945 = vadd.f32 0.0, %v944
      %946 = vmatmul.f32.gmra.mxu0 %v880
      %v947 = vpop.f32.mrf.mxu0
      %v948 = vadd.f32 0.0, %v947
      %949 = vmatmul.f32.gmra.mxu0 %v883
      %v950 = vpop.f32.mrf.mxu0
      %v951 = vadd.f32 0.0, %v950
      %952 = vmatmul.f32.gmra.mxu0 %v886
      %v953 = vpop.f32.mrf.mxu0
      %v954 = vadd.f32 0.0, %v953
      %955 = vmatmul.f32.gmra.mxu0 %v889
      %v956 = vpop.f32.mrf.mxu0
      %v957 = vadd.f32 0.0, %v956
      %958 = vmatmul.f32.gmra.mxu0 %v892
      %v959 = vpop.f32.mrf.mxu0
      %v960 = vadd.f32 0.0, %v959
      %961 = vmatmul.f32.gmra.mxu0 %v895
      %v962 = vpop.f32.mrf.mxu0
      %v963 = vadd.f32 0.0, %v962
      %964 = vmatmul.f32.gmra.mxu0 %v898
      %v965 = vpop.f32.mrf.mxu0
      %v966 = vadd.f32 0.0, %v965
      %967 = vmatmul.f32.gmra.mxu0 %v901
      %v968 = vpop.f32.mrf.mxu0
      %v969 = vadd.f32 0.0, %v968
      %970 = vmatmul.f32.gmra.mxu0 %v904
      %v971 = vpop.f32.mrf.mxu0
      %v972 = vadd.f32 0.0, %v971
      %973 = vmatmul.f32.gmra.mxu0 %v907
      %v974 = vpop.f32.mrf.mxu0
      %v975 = vadd.f32 0.0, %v974
      %976 = vdwg.mxu0
      %v978 = vsel %vm860, %v716, 0
      %v981 = vsel %vm860, %v717, 0
      %v984 = vsel %vm860, %v718, 0
      %v987 = vsel %vm860, %v719, 0
      %v990 = vsel %vm860, %v720, 0
      %v993 = vsel %vm860, %v721, 0
      %v996 = vsel %vm860, %v722, 0
      %v999 = vsel %vm860, %v723, 0
      %v1002 = vsel %vm860, %v724, 0
      %v1005 = vsel %vm860, %v725, 0
      %v1008 = vsel %vm860, %v726, 0
      %v1011 = vsel %vm860, %v727, 0
      %v1014 = vsel %vm860, %v728, 0
      %v1017 = vsel %vm860, %v729, 0
      %v1020 = vsel %vm860, %v730, 0
      %v1023 = vsel %vm860, %v731, 0
      %v1026 = vsel %vm534, %v508, 0
      %1028 = vmatpush.msra.mxu0 0.0
      %1029 = vmatpush.msra.mxu0 0.0
      %1030 = vmatpush.msra.mxu0 0.0
      %1031 = vmatpush.msra.mxu0 0.0
      %1032 = vmatpush.msra.mxu0 0.0
      %1033 = vmatpush.msra.mxu0 0.0
      %1034 = vmatpush.msra.mxu0 0.0
      %1035 = vmatpush.msra.mxu0 0.0
      %1036 = vmatpush.msra.mxu0 0.0
      %1037 = vmatpush.msra.mxu0 0.0
      %1038 = vmatpush.msra.mxu0 0.0
      %1039 = vmatpush.msra.mxu0 0.0
      %1040 = vmatpush.msra.mxu0 0.0
      %1041 = vmatpush.msra.mxu0 0.0
      %1042 = vmatpush.msra.mxu0 %v1026
      %1043 = vmatpush.msra.mxu0 %v507
      %1044 = vmatmul.f32.gmra.mxu0 %v978
      %v1045 = vpop.f32.mrf.mxu0
      %v1046 = vadd.f32 %v930, %v1045
      %1047 = vmatmul.f32.gmra.mxu0 %v981
      %v1048 = vpop.f32.mrf.mxu0
      %v1049 = vadd.f32 %v933, %v1048
      %1050 = vmatmul.f32.gmra.mxu0 %v984
      %v1051 = vpop.f32.mrf.mxu0
      %v1052 = vadd.f32 %v936, %v1051
      %1053 = vmatmul.f32.gmra.mxu0 %v987
      %v1054 = vpop.f32.mrf.mxu0
      %v1055 = vadd.f32 %v939, %v1054
      %1056 = vmatmul.f32.gmra.mxu0 %v990
      %v1057 = vpop.f32.mrf.mxu0
      %v1058 = vadd.f32 %v942, %v1057
      %1059 = vmatmul.f32.gmra.mxu0 %v993
      %v1060 = vpop.f32.mrf.mxu0
      %v1061 = vadd.f32 %v945, %v1060
      %1062 = vmatmul.f32.gmra.mxu0 %v996
      %v1063 = vpop.f32.mrf.mxu0
      %v1064 = vadd.f32 %v948, %v1063
      %1065 = vmatmul.f32.gmra.mxu0 %v999
      %v1066 = vpop.f32.mrf.mxu0
      %v1067 = vadd.f32 %v951, %v1066
      %1068 = vmatmul.f32.gmra.mxu0 %v1002
      %v1069 = vpop.f32.mrf.mxu0
      %v1070 = vadd.f32 %v954, %v1069
      %1071 = vmatmul.f32.gmra.mxu0 %v1005
      %v1072 = vpop.f32.mrf.mxu0
      %v1073 = vadd.f32 %v957, %v1072
      %1074 = vmatmul.f32.gmra.mxu0 %v1008
      %v1075 = vpop.f32.mrf.mxu0
      %v1076 = vadd.f32 %v960, %v1075
      %1077 = vmatmul.f32.gmra.mxu0 %v1011
      %v1078 = vpop.f32.mrf.mxu0
      %v1079 = vadd.f32 %v963, %v1078
      %1080 = vmatmul.f32.gmra.mxu0 %v1014
      %v1081 = vpop.f32.mrf.mxu0
      %v1082 = vadd.f32 %v966, %v1081
      %1083 = vmatmul.f32.gmra.mxu0 %v1017
      %v1084 = vpop.f32.mrf.mxu0
      %v1085 = vadd.f32 %v969, %v1084
      %1086 = vmatmul.f32.gmra.mxu0 %v1020
      %v1087 = vpop.f32.mrf.mxu0
      %v1088 = vadd.f32 %v972, %v1087
      %1089 = vmatmul.f32.gmra.mxu0 %v1023
      %v1090 = vpop.f32.mrf.mxu0
      %v1091 = vadd.f32 %v975, %v1090
      %1092 = vdwg.mxu0
      %vm1093 = vcmask 1046528
      %v1094 = vrot.slane %v498, 1
      %v1095 = vrot.slane %v499, 1
      %v1096 = vsel %vm1093, %v1094, %v1095
      %v1097 = vrot.slane %v473, 1
      %v1098 = vrot.slane %v474, 1
      %v1099 = vsel %vm1093, %v1097, %v1098
      %v1100 = vrot.slane %v475, 1
      %v1101 = vrot.slane %v476, 1
      %v1102 = vsel %vm1093, %v1100, %v1101
      %v1103 = vrot.slane %v477, 1
      %v1104 = vrot.slane %v478, 1
      %v1105 = vsel %vm1093, %v1103, %v1104
      %v1106 = vrot.slane %v479, 1
      %v1107 = vrot.slane %v480, 1
      %v1108 = vsel %vm1093, %v1106, %v1107
      %v1109 = vrot.slane %v481, 1
      %v1110 = vrot.slane %v482, 1
      %v1111 = vsel %vm1093, %v1109, %v1110
      %v1112 = vrot.slane %v483, 1
      %v1113 = vrot.slane %v484, 1
      %v1114 = vsel %vm1093, %v1112, %v1113
      %v1115 = vrot.slane %v485, 1
      %v1116 = vrot.slane %v486, 1
      %v1117 = vsel %vm1093, %v1115, %v1116
      %v1118 = vrot.slane %v487, 1
      %v1119 = vrot.slane %v488, 1
      %v1120 = vsel %vm1093, %v1118, %v1119
      %v1121 = vrot.slane %v505, 1
      %v1122 = vrot.slane %v506, 1
      %v1123 = vsel %vm1093, %v1121, %v1122
      %v1142 = vsel %vm1093, %v1095, 0.0
      %v1143 = vsel %vm1093, %v1098, 0.0
      %v1144 = vsel %vm1093, %v1101, 0.0
      %v1145 = vsel %vm1093, %v1104, 0.0
      %v1146 = vsel %vm1093, %v1107, 0.0
      %v1147 = vsel %vm1093, %v1110, 0.0
      %v1148 = vsel %vm1093, %v1113, 0.0
      %v1149 = vsel %vm1093, %v1116, 0.0
      %v1150 = vsel %vm1093, %v1119, 0.0
      %v1151 = vsel %vm1093, %v1122, 0.0
      %1160 = vrot.lane.b32.xlu0 %v1099, 3
      %v1161 = vpop.permute.xlu0 %1160
      %1162 = vrot.lane.b32.xlu0 %v1143, 3
      %v1163 = vpop.permute.xlu0 %1162
      %1164 = vrot.lane.b32.xlu0 %v1102, 3
      %v1165 = vpop.permute.xlu0 %1164
      %1166 = vrot.lane.b32.xlu0 %v1144, 3
      %v1167 = vpop.permute.xlu0 %1166
      %1168 = vrot.lane.b32.xlu0 %v1105, 3
      %v1169 = vpop.permute.xlu0 %1168
      %1170 = vrot.lane.b32.xlu0 %v1145, 3
      %v1171 = vpop.permute.xlu0 %1170
      %1172 = vrot.lane.b32.xlu0 %v1108, 3
      %v1173 = vpop.permute.xlu0 %1172
      %1174 = vrot.lane.b32.xlu0 %v1146, 3
      %v1175 = vpop.permute.xlu0 %1174
      %1176 = vrot.lane.b32.xlu0 %v1111, 3
      %v1177 = vpop.permute.xlu0 %1176
      %1178 = vrot.lane.b32.xlu0 %v1147, 3
      %v1179 = vpop.permute.xlu0 %1178
      %1180 = vrot.lane.b32.xlu0 %v1114, 3
      %v1181 = vpop.permute.xlu0 %1180
      %1182 = vrot.lane.b32.xlu0 %v1148, 3
      %v1183 = vpop.permute.xlu0 %1182
      %1184 = vrot.lane.b32.xlu0 %v1117, 3
      %v1185 = vpop.permute.xlu0 %1184
      %1186 = vrot.lane.b32.xlu0 %v1149, 3
      %v1187 = vpop.permute.xlu0 %1186
      %1188 = vrot.lane.b32.xlu0 %v1120, 3
      %v1189 = vpop.permute.xlu0 %1188
      %1190 = vrot.lane.b32.xlu0 %v1150, 3
      %v1191 = vpop.permute.xlu0 %1190
      %1209 = vrot.lane.b32.xlu0 %v1102, 6
      %v1210 = vpop.permute.xlu0 %1209
      %1211 = vrot.lane.b32.xlu0 %v1144, 6
      %v1212 = vpop.permute.xlu0 %1211
      %1213 = vrot.lane.b32.xlu0 %v1105, 6
      %v1214 = vpop.permute.xlu0 %1213
      %1215 = vrot.lane.b32.xlu0 %v1145, 6
      %v1216 = vpop.permute.xlu0 %1215
      %1217 = vrot.lane.b32.xlu0 %v1108, 6
      %v1218 = vpop.permute.xlu0 %1217
      %1219 = vrot.lane.b32.xlu0 %v1146, 6
      %v1220 = vpop.permute.xlu0 %1219
      %1221 = vrot.lane.b32.xlu0 %v1111, 6
      %v1222 = vpop.permute.xlu0 %1221
      %1223 = vrot.lane.b32.xlu0 %v1147, 6
      %v1224 = vpop.permute.xlu0 %1223
      %1225 = vrot.lane.b32.xlu0 %v1114, 6
      %v1226 = vpop.permute.xlu0 %1225
      %1227 = vrot.lane.b32.xlu0 %v1148, 6
      %v1228 = vpop.permute.xlu0 %1227
      %1229 = vrot.lane.b32.xlu0 %v1117, 6
      %v1230 = vpop.permute.xlu0 %1229
      %1231 = vrot.lane.b32.xlu0 %v1149, 6
      %v1232 = vpop.permute.xlu0 %1231
      %1233 = vrot.lane.b32.xlu0 %v1120, 6
      %v1234 = vpop.permute.xlu0 %1233
      %1235 = vrot.lane.b32.xlu0 %v1150, 6
      %v1236 = vpop.permute.xlu0 %1235
      %1237 = vrot.lane.b32.xlu0 %v1123, 6
      %v1238 = vpop.permute.xlu0 %1237
      %1239 = vrot.lane.b32.xlu0 %v1151, 6
      %v1240 = vpop.permute.xlu0 %1239
      %v1257 = vsel %vm698, %v1096, %v1161
      %v1258 = vsel %vm698, %v1142, %v1163
      %v1259 = vsel %vm698, %v1099, %v1165
      %v1260 = vsel %vm698, %v1143, %v1167
      %v1261 = vsel %vm698, %v1102, %v1169
      %v1262 = vsel %vm698, %v1144, %v1171
      %v1263 = vsel %vm698, %v1105, %v1173
      %v1264 = vsel %vm698, %v1145, %v1175
      %v1265 = vsel %vm698, %v1108, %v1177
      %v1266 = vsel %vm698, %v1146, %v1179
      %v1267 = vsel %vm698, %v1111, %v1181
      %v1268 = vsel %vm698, %v1147, %v1183
      %v1269 = vsel %vm698, %v1114, %v1185
      %v1270 = vsel %vm698, %v1148, %v1187
      %v1271 = vsel %vm698, %v1117, %v1189
      %v1272 = vsel %vm698, %v1149, %v1191
      %v1273 = vsel %vm715, %v1257, %v1210
      %v1274 = vsel %vm715, %v1258, %v1212
      %v1275 = vsel %vm715, %v1259, %v1214
      %v1276 = vsel %vm715, %v1260, %v1216
      %v1277 = vsel %vm715, %v1261, %v1218
      %v1278 = vsel %vm715, %v1262, %v1220
      %v1279 = vsel %vm715, %v1263, %v1222
      %v1280 = vsel %vm715, %v1264, %v1224
      %v1281 = vsel %vm715, %v1265, %v1226
      %v1282 = vsel %vm715, %v1266, %v1228
      %v1283 = vsel %vm715, %v1267, %v1230
      %v1284 = vsel %vm715, %v1268, %v1232
      %v1285 = vsel %vm715, %v1269, %v1234
      %v1286 = vsel %vm715, %v1270, %v1236
      %v1287 = vsel %vm715, %v1271, %v1238
      %v1288 = vsel %vm715, %v1272, %v1240
      %v1290 = vsel %vm860, %v1273, 0
      %v1293 = vsel %vm860, %v1274, 0
      %v1296 = vsel %vm860, %v1275, 0
      %v1299 = vsel %vm860, %v1276, 0
      %v1302 = vsel %vm860, %v1277, 0
      %v1305 = vsel %vm860, %v1278, 0
      %v1308 = vsel %vm860, %v1279, 0
      %v1311 = vsel %vm860, %v1280, 0
      %v1314 = vsel %vm860, %v1281, 0
      %v1317 = vsel %vm860, %v1282, 0
      %v1320 = vsel %vm860, %v1283, 0
      %v1323 = vsel %vm860, %v1284, 0
      %v1326 = vsel %vm860, %v1285, 0
      %v1329 = vsel %vm860, %v1286, 0
      %v1332 = vsel %vm860, %v1287, 0
      %v1335 = vsel %vm860, %v1288, 0
      %v1338 = vsel %vm534, %v512, 0
      %1340 = vmatpush.msra.mxu0 0.0
      %1341 = vmatpush.msra.mxu0 0.0
      %1342 = vmatpush.msra.mxu0 0.0
      %1343 = vmatpush.msra.mxu0 0.0
      %1344 = vmatpush.msra.mxu0 0.0
      %1345 = vmatpush.msra.mxu0 0.0
      %1346 = vmatpush.msra.mxu0 0.0
      %1347 = vmatpush.msra.mxu0 0.0
      %1348 = vmatpush.msra.mxu0 0.0
      %1349 = vmatpush.msra.mxu0 0.0
      %1350 = vmatpush.msra.mxu0 0.0
      %1351 = vmatpush.msra.mxu0 0.0
      %1352 = vmatpush.msra.mxu0 0.0
      %1353 = vmatpush.msra.mxu0 0.0
      %1354 = vmatpush.msra.mxu0 %v1338
      %1355 = vmatpush.msra.mxu0 %v511
      %1356 = vmatmul.f32.gmra.mxu0 %v1290
      %v1357 = vpop.f32.mrf.mxu0
      %v1358 = vadd.f32 0.0, %v1357
      %1359 = vmatmul.f32.gmra.mxu0 %v1293
      %v1360 = vpop.f32.mrf.mxu0
      %v1361 = vadd.f32 0.0, %v1360
      %1362 = vmatmul.f32.gmra.mxu0 %v1296
      %v1363 = vpop.f32.mrf.mxu0
      %v1364 = vadd.f32 0.0, %v1363
      %1365 = vmatmul.f32.gmra.mxu0 %v1299
      %v1366 = vpop.f32.mrf.mxu0
      %v1367 = vadd.f32 0.0, %v1366
      %1368 = vmatmul.f32.gmra.mxu0 %v1302
      %v1369 = vpop.f32.mrf.mxu0
      %v1370 = vadd.f32 0.0, %v1369
      %1371 = vmatmul.f32.gmra.mxu0 %v1305
      %v1372 = vpop.f32.mrf.mxu0
      %v1373 = vadd.f32 0.0, %v1372
      %1374 = vmatmul.f32.gmra.mxu0 %v1308
      %v1375 = vpop.f32.mrf.mxu0
      %v1376 = vadd.f32 0.0, %v1375
      %1377 = vmatmul.f32.gmra.mxu0 %v1311
      %v1378 = vpop.f32.mrf.mxu0
      %v1379 = vadd.f32 0.0, %v1378
      %1380 = vmatmul.f32.gmra.mxu0 %v1314
      %v1381 = vpop.f32.mrf.mxu0
      %v1382 = vadd.f32 0.0, %v1381
      %1383 = vmatmul.f32.gmra.mxu0 %v1317
      %v1384 = vpop.f32.mrf.mxu0
      %v1385 = vadd.f32 0.0, %v1384
      %1386 = vmatmul.f32.gmra.mxu0 %v1320
      %v1387 = vpop.f32.mrf.mxu0
      %v1388 = vadd.f32 0.0, %v1387
      %1389 = vmatmul.f32.gmra.mxu0 %v1323
      %v1390 = vpop.f32.mrf.mxu0
      %v1391 = vadd.f32 0.0, %v1390
      %1392 = vmatmul.f32.gmra.mxu0 %v1326
      %v1393 = vpop.f32.mrf.mxu0
      %v1394 = vadd.f32 0.0, %v1393
      %1395 = vmatmul.f32.gmra.mxu0 %v1329
      %v1396 = vpop.f32.mrf.mxu0
      %v1397 = vadd.f32 0.0, %v1396
      %1398 = vmatmul.f32.gmra.mxu0 %v1332
      %v1399 = vpop.f32.mrf.mxu0
      %v1400 = vadd.f32 0.0, %v1399
      %1401 = vmatmul.f32.gmra.mxu0 %v1335
      %v1402 = vpop.f32.mrf.mxu0
      %v1403 = vadd.f32 0.0, %v1402
      %1404 = vdwg.mxu0
      %v1405 = vadd.f32 %v1046, %v1358
      %v1406 = vadd.f32 %v1049, %v1361
      %v1407 = vadd.f32 %v1052, %v1364
      %v1408 = vadd.f32 %v1055, %v1367
      %v1409 = vadd.f32 %v1058, %v1370
      %v1410 = vadd.f32 %v1061, %v1373
      %v1411 = vadd.f32 %v1064, %v1376
      %v1412 = vadd.f32 %v1067, %v1379
      %v1413 = vadd.f32 %v1070, %v1382
      %v1414 = vadd.f32 %v1073, %v1385
      %v1415 = vadd.f32 %v1076, %v1388
      %v1416 = vadd.f32 %v1079, %v1391
      %v1417 = vadd.f32 %v1082, %v1394
      %v1418 = vadd.f32 %v1085, %v1397
      %v1419 = vadd.f32 %v1088, %v1400
      %v1420 = vadd.f32 %v1091, %v1403
      %v1422 = vperm.slane %v513, 0
      %v1424 = vadd.f32 %v1405, %v1422
      %v1425 = vadd.f32 %v1406, %v1422
      %v1426 = vadd.f32 %v1407, %v1422
      %v1427 = vadd.f32 %v1408, %v1422
      %v1428 = vadd.f32 %v1409, %v1422
      %v1429 = vadd.f32 %v1410, %v1422
      %v1430 = vadd.f32 %v1411, %v1422
      %v1431 = vadd.f32 %v1412, %v1422
      %v1432 = vadd.f32 %v1413, %v1422
      %v1433 = vadd.f32 %v1414, %v1422
      %v1434 = vadd.f32 %v1415, %v1422
      %v1435 = vadd.f32 %v1416, %v1422
      %v1436 = vadd.f32 %v1417, %v1422
      %v1437 = vadd.f32 %v1418, %v1422
      %v1438 = vadd.f32 %v1419, %v1422
      %v1439 = vadd.f32 %v1420, %v1422
      %vm1440 = vcmask 64512
      %1441 = vst.msk [vmem:[%s446] sm:$0xff] %vm1440, %v1424
      %1442 = vst.msk [vmem:[%s446 + $0x8] sm:$0xff] %vm1440, %v1425
      %1443 = vst.msk [vmem:[%s446 + $0x10] sm:$0xff] %vm1440, %v1426
      %1444 = vst.msk [vmem:[%s446 + $0x18] sm:$0xff] %vm1440, %v1427
      %1445 = vst.msk [vmem:[%s446 + $0x20] sm:$0xff] %vm1440, %v1428
      %1446 = vst.msk [vmem:[%s446 + $0x28] sm:$0xff] %vm1440, %v1429
      %1447 = vst.msk [vmem:[%s446 + $0x30] sm:$0xff] %vm1440, %v1430
      %1448 = vst.msk [vmem:[%s446 + $0x38] sm:$0xff] %vm1440, %v1431
      %1449 = vst.msk [vmem:[%s446 + $0x40] sm:$0xff] %vm1440, %v1432
      %1450 = vst.msk [vmem:[%s446 + $0x48] sm:$0xff] %vm1440, %v1433
      %1451 = vst.msk [vmem:[%s446 + $0x50] sm:$0xff] %vm1440, %v1434
      %1452 = vst.msk [vmem:[%s446 + $0x58] sm:$0xff] %vm1440, %v1435
      %1453 = vst.msk [vmem:[%s446 + $0x60] sm:$0xff] %vm1440, %v1436
      %1454 = vst.msk [vmem:[%s446 + $0x68] sm:$0xff] %vm1440, %v1437
      %1455 = vst.msk [vmem:[%s446 + $0x70] sm:$0xff] %vm1440, %v1438
      %1456 = vst.msk [vmem:[%s446 + $0x78] sm:$0xff] %vm1440, %v1439
      %s1457 = smul.u32 8, %s22
      %p1458 = scmp.lt.s32.totalorder %s21, 1
      %s1459 = scalar_select %p1458, %s21, 1
      %p1460 = scmp.lt.s32.totalorder %s1457, 15
      %s1461 = scalar_select %p1460, %s1457, 15
      %s1462 = smul.addr %s1461, 2
      %s1463 = smul.addr %s1459, 32
      %s1464 = sadd.s32 %s1462, %s1463
      %s1465 = smul.addr %s1464, 8
      %s1466 = scalar_lea.vmem %s6, %s1465
      // Predicated region
      $region45: #{tpu_custom_call.1} parent=43 // pred_check
        %p1467 = pneg %p220
      $region46: #{tpu_custom_call.1} parent=43 // pred_check_branch
        %1469 = sbr.rel (%p1467) target = $region48
      $region47: #{tpu_custom_call.1} parent=43 // pred_region
        %s1470 = smul.u32 8, %s22
      $region48: #{tpu_custom_call.1} parent=43 // pred_fallthru
        _
    $region44: #{tpu_custom_call.1} parent=5 // pred_fallthru
      _
    %p1471 = scmp.le.s32.totalorder 2, %s12
    // Predicated region
    $region49: #{tpu_custom_call.1} parent=5 // pred_check
      %p1472 = pneg %p1471
    $region50: #{tpu_custom_call.1} parent=5 // pred_check_branch
      %1474 = sbr.rel (%p1472) target = $region52
    $region51: #{tpu_custom_call.1} parent=5 // pred_region
      %s1475 = ssub.s32 %s12, 2
      // Predicated region
      $region53: #{tpu_custom_call.1} parent=51 // pred_check
        %p1476 = pneg %p226
      $region54: #{tpu_custom_call.1} parent=51 // pred_check_branch
        %1478 = sbr.rel (%p1476) target = $region56
      $region55: #{tpu_custom_call.1} parent=51 // pred_region
        %s1479 = smul.u32 8, %s24
        %p1480 = scmp.lt.s32.totalorder %s23, 1
        %s1481 = scalar_select %p1480, %s23, 1
        %p1482 = scmp.lt.s32.totalorder %s1479, 15
        %s1483 = scalar_select %p1482, %s1479, 15
        %s1484 = smul.addr %s1483, 2
        %s1485 = smul.addr %s1481, 32
        %s1486 = sadd.s32 %s1484, %s1485
        %s1487 = smul.addr %s1486, 8
        %s1488 = scalar_lea.vmem %s6, %s1487
      $region56: #{tpu_custom_call.1} parent=51 // pred_fallthru
        _
    $region52: #{tpu_custom_call.1} parent=5 // pred_fallthru
      _
  $region6: #{tpu_custom_call.1} parent=0 // loop_footer
    %s16 = sadd.s32 1, %s12
  $region7: #{tpu_custom_call.1} parent=0 // loop_footer_branch
    %11 = sbr.rel target = $region3
  $region8: #{tpu_custom_call.1} parent=0 // loop_exit
    _

</llo_original>
